<compile_context>
chip_gen: v7x
topology: tpu7x:2x2x1
jax: 0.10.0
libtpu: 0.0.40
codegen_flags: <defaults>
</compile_context>

<pallas_src>
import functools

import jax
import jax.numpy as jnp
from jax import lax
from jax.experimental import pallas as pl
from jax.experimental.pallas import tpu as pltpu

_VMEM_LIMIT = 48 * 1024 * 1024      # safe on v7x (64 MiB/TC), plenty for our tiles
_MASK_VALUE = -1e30                 # finite "minus infinity" for padded kv columns

# Row indices of the packed pool-scale / LayerNorm parameter slab (9, hd_pad).
_W_Q, _W_K, _W_V = 0, 1, 2
_G_Q, _B_Q, _G_K, _B_K, _G_V, _B_V = 3, 4, 5, 6, 7, 8


def _round_up(x, m):
    return ((x + m - 1) // m) * m


def _choose_tile(d, prefs=(512, 256, 128)):
    """Pick a 128-multiple tile: prefer exact division, else modest padding."""
    for t in prefs:
        if d % t == 0:
            return t
    for t in prefs:
        if (-d) % t <= max(128, d // 8):
            return t
    return 128


def _compiler_params(semantics):
    return pltpu.CompilerParams(
        dimension_semantics=semantics,
        vmem_limit_bytes=_VMEM_LIMIT,
    )


# ----------------------------------------------------------------------------
# Tiled linear kernels (bf16 MXU operands, fp32 accumulation)
# ----------------------------------------------------------------------------
def _linear_nobias_kernel(x_ref, w_ref, o_ref, acc_ref):
    @pl.when(pl.program_id(2) == 0)
    def _init():
        acc_ref[...] = jnp.zeros_like(acc_ref)

    acc_ref[...] += jnp.dot(x_ref[...], w_ref[...],
                            preferred_element_type=jnp.float32)

    @pl.when(pl.program_id(2) == pl.num_programs(2) - 1)
    def _fin():
        o_ref[...] = acc_ref[...].astype(o_ref.dtype)


def _linear_bias_kernel(x_ref, w_ref, b_ref, o_ref, acc_ref):
    @pl.when(pl.program_id(2) == 0)
    def _init():
        acc_ref[...] = jnp.zeros_like(acc_ref)

    acc_ref[...] += jnp.dot(x_ref[...], w_ref[...],
                            preferred_element_type=jnp.float32)

    @pl.when(pl.program_id(2) == pl.num_programs(2) - 1)
    def _fin():
        o_ref[...] = (acc_ref[...] + b_ref[...].astype(jnp.float32)
                      ).astype(o_ref.dtype)


def _linear(x2d, w, bias=None, out_dtype=jnp.float32):
    """(M, K) @ (K, N) [+ bias(N,)] with zero padding to clean tile multiples."""
    M, K = x2d.shape
    Kw, Nout = w.shape
    assert K == Kw

    tm = _choose_tile(M)
    tn = _choose_tile(Nout)
    # Keep the whole reduction resident when it fits (single K step: each A/B
    # tile is streamed exactly once -- good for bandwidth-limited v5e).
    Kp = _round_up(K, 128)
    if Kp <= 2048:
        tk = Kp
    else:
        tk = 512
        Kp = _round_up(K, tk)
    Mp = _round_up(M, tm)
    Np = _round_up(Nout, tn)

    xb = jnp.pad(x2d.astype(jnp.bfloat16), ((0, Mp - M), (0, Kp - K)))
    wb = jnp.pad(w.astype(jnp.bfloat16), ((0, Kp - K), (0, Np - Nout)))

    grid = (Mp // tm, Np // tn, Kp // tk)
    in_specs = [
        pl.BlockSpec((tm, tk), lambda i, j, k: (i, k)),
        pl.BlockSpec((tk, tn), lambda i, j, k: (k, j)),
    ]
    args = [xb, wb]
    if bias is None:
        kernel = _linear_nobias_kernel
    else:
        kernel = _linear_bias_kernel
        b2 = jnp.pad(bias.reshape(1, Nout).astype(jnp.float32),
                     ((0, 0), (0, Np - Nout)))
        in_specs.append(pl.BlockSpec((1, tn), lambda i, j, k: (0, j)))
        args.append(b2)

    cost = pl.CostEstimate(
        flops=2 * Mp * Kp * Np,
        transcendentals=0,
        bytes_accessed=2 * (Mp * Kp + Kp * Np)
        + jnp.dtype(out_dtype).itemsize * Mp * Np,
    )

    out = pl.pallas_call(
        kernel,
        out_shape=jax.ShapeDtypeStruct((Mp, Np), out_dtype),
        grid=grid,
        in_specs=in_specs,
        out_specs=pl.BlockSpec((tm, tn), lambda i, j, k: (i, j)),
        scratch_shapes=[pltpu.VMEM((tm, tn), jnp.float32)],
        compiler_params=_compiler_params(("parallel", "parallel", "arbitrary")),
        cost_estimate=cost,
    )(*args)
    return out[:M, :Nout]


# ----------------------------------------------------------------------------
# Fused attention_pool + LayerNorm + flash attention kernel
#   grid = (batch, head, q_block, kv_block);  kv_block is the "arbitrary"
#   reduction axis carried in fp32 VMEM scratch (m, l, acc) plus a resident
#   pooled+normalized+scaled q tile.
# ----------------------------------------------------------------------------
def _msa_flash_kernel(pp_ref, q_raw_ref, k_raw_ref, v_raw_ref, o_ref,
                      qs_ref, acc_ref, m_ref, l_ref, *,
                      head_dim, hw, n_tokens, scale, eps):
    qi = pl.program_id(2)
    ki = pl.program_id(3)
    tq = q_raw_ref.shape[0]
    tkv = k_raw_ref.shape[0]

    pp = pp_ref[...]                       # (9, hd_pad) fp32 packed params
    inv_hd = 1.0 / head_dim

    def pool_norm(raw, row0, w_row, g_row, b_row):
        # Depthwise 1x1x1 conv == per-channel scale of non-CLS tokens (one CLS
        # token at the start of every frame), then LayerNorm(head_dim).
        # Pad lanes (>= head_dim) carry exact zeros from the zero-padded qkv
        # weight columns, so lane sums over the full 128-lane vreg are exact
        # per-head sums; zero gamma/beta keeps pad lanes at zero afterwards.
        x = raw.astype(jnp.float32)                          # (rows, hd_pad)
        rows = x.shape[0]
        idx = row0 + lax.broadcasted_iota(jnp.int32, (rows, 1), 0)
        is_cls = (idx % hw) == 0
        x = x * jnp.where(is_cls, 1.0, pp[w_row:w_row + 1])
        mu = jnp.sum(x, axis=-1, keepdims=True) * inv_hd
        msq = jnp.sum(x * x, axis=-1, keepdims=True) * inv_hd
        var = jnp.maximum(msq - mu * mu, 0.0)
        xn = (x - mu) * lax.rsqrt(var + eps)
        return xn * pp[g_row:g_row + 1] + pp[b_row:b_row + 1]

    @pl.when(ki == 0)
    def _init():
        qn = pool_norm(q_raw_ref[...], qi * tq, _W_Q, _G_Q, _B_Q) * scale
        qs_ref[...] = qn.astype(jnp.bfloat16)
        m_ref[...] = jnp.full(m_ref.shape, -jnp.inf, jnp.float32)
        l_ref[...] = jnp.zeros_like(l_ref)
        acc_ref[...] = jnp.zeros_like(acc_ref)

    kn = pool_norm(k_raw_ref[...], ki * tkv, _W_K, _G_K, _B_K).astype(jnp.bfloat16)
    vn = pool_norm(v_raw_ref[...], ki * tkv, _W_V, _G_V, _B_V).astype(jnp.bfloat16)

    s = lax.dot_general(qs_ref[...], kn, (((1,), (1,)), ((), ())),
                        preferred_element_type=jnp.float32)    # (tq, tkv)
    # Mask padded key/value rows (token index >= n_tokens).
    kv_idx = ki * tkv + lax.broadcasted_iota(jnp.int32, (1, tkv), 1)
    s = jnp.where(kv_idx < n_tokens, s, _MASK_VALUE)

    m_prev = m_ref[...]
    m_new = jnp.maximum(m_prev, jnp.max(s, axis=-1, keepdims=True))
    alpha = jnp.exp(m_prev - m_new)
    p = jnp.exp(s - m_new)
    l_ref[...] = alpha * l_ref[...] + jnp.sum(p, axis=-1, keepdims=True)
    acc_ref[...] = alpha * acc_ref[...] + jnp.dot(
        p.astype(jnp.bfloat16), vn, preferred_element_type=jnp.float32)
    m_ref[...] = m_new

    @pl.when(ki == pl.num_programs(3) - 1)
    def _fin():
        o_ref[...] = (acc_ref[...] * pl.reciprocal(l_ref[...], approx=True)
                      ).astype(o_ref.dtype)


# ----------------------------------------------------------------------------
# Wrapper: full MultiScaleAttention forward
# ----------------------------------------------------------------------------
def multiscale_attention_forward(x, thw_shape, params, *, num_heads):
    """
    x: (B, N, dim) with N = T * (1 + H*W)  (one CLS token per frame)
    Returns (out, q_shape) mirroring the PyTorch module.
    """
    B, N, dim = x.shape
    dim_out = params["w_proj"].shape[1]
    assert dim_out % num_heads == 0
    head_dim = dim_out // num_heads
    hd_pad = _round_up(head_dim, 128)      # lane-dense per-head blocks
    scale = head_dim ** (-0.5)
    eps = 1e-6                             # LayerNorm(..., eps=1e-06) in the module

    T, Hs, Ws = thw_shape
    hw = 1 + Hs * Ws
    assert N == T * hw, "N must equal T*(1+H*W)"
    # TODO(synk): if the target checkpoint uses a single global CLS token
    # (N = 1 + T*H*W) the CLS mask / frame layout must be adapted.

    # --- token blocking / padding for the attention grid
    tb = min(512, _round_up(N, 8))
    n_pad = _round_up(N, tb)
    n_q = n_pad // tb
    n_kv = n_pad // tb

    xp = jnp.pad(x, ((0, 0), (0, n_pad - N), (0, 0)))

    # --- qkv projection with head_dim zero-padded to hd_pad (lane alignment).
    # Column layout of the original weight is [3, num_heads, head_dim].
    w_qkv = params["w_qkv"].reshape(dim, 3, num_heads, head_dim)
    w_qkv = jnp.pad(w_qkv, ((0, 0), (0, 0), (0, 0), (0, hd_pad - head_dim)))
    w_qkv = w_qkv.reshape(dim, 3 * num_heads * hd_pad)

    qkv = _linear(xp.reshape(B * n_pad, dim), w_qkv, bias=None,
                  out_dtype=jnp.bfloat16)
    # NOTE: bf16 qkv activations (fp32 math inside the kernel); expect bf16-level
    # tolerances vs. an fp32 PyTorch reference.
    qkv = qkv.reshape(B, n_pad, 3 * num_heads * hd_pad)

    # --- packed pool scales + LayerNorm affine params, zero-padded lanes.
    def _pad_vec(v, fill=0.0):
        return jnp.pad(v, (0, hd_pad - head_dim), constant_values=fill)

    pp = jnp.stack([
        _pad_vec(params["w_pool_q"], 1.0),
        _pad_vec(params["w_pool_k"], 1.0),
        _pad_vec(params["w_pool_v"], 1.0),
        _pad_vec(params["ln_q_g"]), _pad_vec(params["ln_q_b"]),
        _pad_vec(params["ln_k_g"]), _pad_vec(params["ln_k_b"]),
        _pad_vec(params["ln_v_g"]), _pad_vec(params["ln_v_b"]),
    ], axis=0).astype(jnp.float32)

    cost = pl.CostEstimate(
        flops=4 * B * num_heads * n_pad * n_pad * hd_pad
        + 30 * B * n_pad * 3 * num_heads * hd_pad,
        transcendentals=B * num_heads * n_pad * n_pad,
        bytes_accessed=2 * B * n_pad * 3 * num_heads * hd_pad * (1 + n_q)
        + 2 * B * n_pad * num_heads * hd_pad,
    )

    # The same qkv slab is passed three times with different lane-block index
    # maps (q / k / v thirds), so no 5-D transpose is ever materialized and the
    # q block stays VMEM-resident across the whole kv loop.
    # TODO(synk): for head_dim <= 64 several heads could be packed per MXU call
    # to raise MXU utilization further (one head per grid step today).
    # TODO(synk): for very large N, pre-pooling k/v once would avoid the
    # per-q-block pool+LN recompute inherent to this fused flash formulation.
    attn_out = pl.pallas_call(
        functools.partial(_msa_flash_kernel, head_dim=head_dim, hw=hw,
                          n_tokens=N, scale=scale, eps=eps),
        out_shape=jax.ShapeDtypeStruct((B, n_pad, num_heads * hd_pad),
                                       jnp.bfloat16),
        grid=(B, num_heads, n_q, n_kv),
        in_specs=[
            pl.BlockSpec((9, hd_pad), lambda b, h, qi, ki: (0, 0)),
            pl.BlockSpec((None, tb, hd_pad),
                         lambda b, h, qi, ki: (b, qi, h)),
            pl.BlockSpec((None, tb, hd_pad),
                         lambda b, h, qi, ki: (b, ki, num_heads + h)),
            pl.BlockSpec((None, tb, hd_pad),
                         lambda b, h, qi, ki: (b, ki, 2 * num_heads + h)),
        ],
        out_specs=pl.BlockSpec((None, tb, hd_pad),
                               lambda b, h, qi, ki: (b, qi, h)),
        scratch_shapes=[
            pltpu.VMEM((tb, hd_pad), jnp.bfloat16),   # pooled+LN+scaled q tile
            pltpu.VMEM((tb, hd_pad), jnp.float32),    # acc
            pltpu.VMEM((tb, 1), jnp.float32),         # running max m
            pltpu.VMEM((tb, 1), jnp.float32),         # running sum l
        ],
        compiler_params=_compiler_params(
            ("parallel", "parallel", "parallel", "arbitrary")),
        cost_estimate=cost,
    )(pp, qkv, qkv, qkv)

    # --- output projection; pad w_proj rows to the head-padded feature layout
    # (pad activations are exactly zero, pad weight rows are zero).
    w_proj = params["w_proj"].reshape(num_heads, head_dim, dim_out)
    w_proj = jnp.pad(w_proj, ((0, 0), (0, hd_pad - head_dim), (0, 0)))
    w_proj = w_proj.reshape(num_heads * hd_pad, dim_out)

    out = _linear(attn_out.reshape(B * n_pad, num_heads * hd_pad), w_proj,
                  bias=params["b_proj"], out_dtype=jnp.float32)
    out = out.reshape(B, n_pad, dim_out)[:, :N, :]

    # kernel 1x1x1 / stride 1 pooling leaves thw_shape unchanged.
    q_shape = [T, Hs, Ws]
    return out, q_shape


# ----------------------------------------------------------------------------
# Deterministic parameter construction + run
# ----------------------------------------------------------------------------
def make_params(key, dim, dim_out, num_heads):
    head_dim = dim_out // num_heads
    ks = jax.random.split(key, 8)
    return {
        # Linear weights stored as (in, out) so forward is x @ W
        "w_qkv": 0.05 * jax.random.normal(ks[0], (dim, 3 * dim_out), jnp.float32),
        "w_proj": 0.05 * jax.random.normal(ks[1], (dim_out, dim_out), jnp.float32),
        "b_proj": 0.01 * jax.random.normal(ks[2], (dim_out,), jnp.float32),
        # Depthwise 1x1x1 Conv3d weights: one scalar per channel (shared by heads)
        "w_pool_q": 1.0 + 0.1 * jax.random.normal(ks[3], (head_dim,), jnp.float32),
        "w_pool_k": 1.0 + 0.1 * jax.random.normal(ks[4], (head_dim,), jnp.float32),
        "w_pool_v": 1.0 + 0.1 * jax.random.normal(ks[5], (head_dim,), jnp.float32),
        # LayerNorm(head_dim) affine params
        "ln_q_g": jnp.ones((head_dim,), jnp.float32),
        "ln_q_b": jnp.zeros((head_dim,), jnp.float32),
        "ln_k_g": jnp.ones((head_dim,), jnp.float32),
        "ln_k_b": jnp.zeros((head_dim,), jnp.float32),
        "ln_v_g": jnp.ones((head_dim,), jnp.float32),
        "ln_v_b": jnp.zeros((head_dim,), jnp.float32),
    }


if __name__ == "__main__":
    # Small shapes consistent with the module's token layout:
    # thw = [T, H, W] = [2, 4, 4]; one CLS per frame -> N = T*(1+H*W) = 34
    B = 2
    dim = 32
    dim_out = 32
    num_heads = 4
    thw_shape = [2, 4, 4]
    N = thw_shape[0] * (1 + thw_shape[1] * thw_shape[2])

    key = jax.random.PRNGKey(0)
    kx, kp = jax.random.split(key)
    x = jax.random.normal(kx, (B, N, dim), jnp.float32)
    params = make_params(kp, dim, dim_out, num_heads)

    out, q_shape = multiscale_attention_forward(
        x, thw_shape, params, num_heads=num_heads)
    out = jax.block_until_ready(out)
    assert out.shape == (B, N, dim_out)
    assert q_shape == thw_shape
    assert bool(jnp.all(jnp.isfinite(out)))
    # TODO(synk): rel_pos_spatial / rel_pos_temporal, long-memory early fusion
    # and causal-mask branches are config-disabled in this configuration and
    # are not implemented.
    print("KERNEL_OK")
</pallas_src>

<mosaic_0001>
module attributes {stable_mosaic.version = 11 : i64} {
  func.func @_linear_nobias_kernel(%arg0: i32, %arg1: i32, %arg2: i32, %arg3: memref<128x128xbf16, #tpu.memory_space<vmem>>, %arg4: memref<128x512xbf16, #tpu.memory_space<vmem>>, %arg5: memref<128x512xbf16, #tpu.memory_space<vmem>>, %arg6: memref<128x512xf32, #tpu.memory_space<vmem>>) attributes {dimension_semantics = [#tpu.dimension_semantics<parallel>, #tpu.dimension_semantics<parallel>, #tpu.dimension_semantics<arbitrary>], iteration_bounds = array<i64: 1, 3, 1>, scalar_prefetch = 0 : i64, scratch_operands = 1 : i64, tpu.core_type = #tpu.core_type<tc>, window_params = [{transform_indices = @transform_0, window_bounds = array<i64: 128, 128>}, {transform_indices = @transform_1, window_bounds = array<i64: 128, 512>}, {transform_indices = @transform_2, window_bounds = array<i64: 128, 512>}]} {
    %c0_i32 = arith.constant 0 : i32
    %0 = arith.cmpi eq, %arg2, %c0_i32 : i32
    %1 = arith.extui %0 : i1 to i32
    %c0_i32_0 = arith.constant 0 : i32
    %2 = arith.cmpi ne, %1, %c0_i32_0 : i32
    scf.if %2 {
      %cst_10 = arith.constant 0.000000e+00 : f32
      %12 = vector.broadcast %cst_10 : f32 to vector<128x512xf32>
      %c0_11 = arith.constant 0 : index
      %c0_12 = arith.constant 0 : index
      %13 = vector.load %arg6[%c0_11, %c0_12] : memref<128x512xf32, #tpu.memory_space<vmem>>, vector<128x512xf32>
      tpu.vector_store %arg6[%c0_11, %c0_12], %12 {strides = array<i32>} : memref<128x512xf32, #tpu.memory_space<vmem>>, vector<128x512xf32>,
    } else {
    }
    %c0 = arith.constant 0 : index
    %c0_1 = arith.constant 0 : index
    %3 = vector.load %arg6[%c0, %c0_1] : memref<128x512xf32, #tpu.memory_space<vmem>>, vector<128x512xf32>
    %c0_2 = arith.constant 0 : index
    %c0_3 = arith.constant 0 : index
    %4 = vector.load %arg3[%c0_2, %c0_3] : memref<128x128xbf16, #tpu.memory_space<vmem>>, vector<128x128xbf16>
    %c0_4 = arith.constant 0 : index
    %c0_5 = arith.constant 0 : index
    %5 = vector.load %arg4[%c0_4, %c0_5] : memref<128x512xbf16, #tpu.memory_space<vmem>>, vector<128x512xbf16>
    %cst = arith.constant dense<0.000000e+00> : vector<128x512xf32>
    %6 = tpu.matmul %4, %5, %cst {dimension_numbers = #tpu.dot_dimension_numbers<[1], [0], [0], [1], [0, 0, 1, 1], [], []>} : vector<128x128xbf16>, vector<128x512xbf16>, vector<128x512xf32> -> vector<128x512xf32>
    %7 = arith.addf %3, %6 : vector<128x512xf32>
    %c0_6 = arith.constant 0 : index
    %c0_7 = arith.constant 0 : index
    %8 = vector.load %arg6[%c0_6, %c0_7] : memref<128x512xf32, #tpu.memory_space<vmem>>, vector<128x512xf32>
    tpu.vector_store %arg6[%c0_6, %c0_7], %7 {strides = array<i32>} : memref<128x512xf32, #tpu.memory_space<vmem>>, vector<128x512xf32>,
    %c0_i32_8 = arith.constant 0 : i32
    %9 = arith.cmpi eq, %arg2, %c0_i32_8 : i32
    %10 = arith.extui %9 : i1 to i32
    %c0_i32_9 = arith.constant 0 : i32
    %11 = arith.cmpi ne, %10, %c0_i32_9 : i32
    scf.if %11 {
      %c0_10 = arith.constant 0 : index
      %c0_11 = arith.constant 0 : index
      %12 = vector.load %arg6[%c0_10, %c0_11] : memref<128x512xf32, #tpu.memory_space<vmem>>, vector<128x512xf32>
      %13 = arith.truncf %12 : vector<128x512xf32> to vector<128x512xbf16>
      %c0_12 = arith.constant 0 : index
      %c0_13 = arith.constant 0 : index
      %14 = vector.load %arg5[%c0_12, %c0_13] : memref<128x512xbf16, #tpu.memory_space<vmem>>, vector<128x512xbf16>
      tpu.vector_store %arg5[%c0_12, %c0_13], %13 {strides = array<i32>} : memref<128x512xbf16, #tpu.memory_space<vmem>>, vector<128x512xbf16>,
    } else {
    }
    return
  }
  func.func @transform_0(%arg0: i32, %arg1: i32, %arg2: i32) -> (i32, i32) {
    %c0_i32 = arith.constant 0 : i32
    return %arg0, %arg2 : i32, i32
  }
  func.func @transform_1(%arg0: i32, %arg1: i32, %arg2: i32) -> (i32, i32) {
    %c0_i32 = arith.constant 0 : i32
    return %arg2, %arg1 : i32, i32
  }
  func.func @transform_2(%arg0: i32, %arg1: i32, %arg2: i32) -> (i32, i32) {
    %c0_i32 = arith.constant 0 : i32
    return %arg0, %arg1 : i32, i32
  }
}

</mosaic_0001>

<llo_original>
// kernel: tpu_custom_call.1
$region0: #{tpu_custom_call.1}
  #allocation0 [shape = 'u32[]', space=smem, size = 0x4, offset = 0x4, fixed_abs, tag = 'smem constant byte address 0x4 - core index']
  #allocation1 [shape = 'u32[144,128]{1,0:T(1,128)}', space=vmem, size = 0x12000, scoped, tag = 'internal scratch']
  #allocation2 [shape = 'f32[128,512]{1,0:T(8,128)}', space=vmem, size = 0x40000, scoped, tag = 'scratch operand']
  %s0 = inlined_call_operand.hbm [shape: bf16[128,128], index: 0, kind: input, shape index: {}]
  %s1 = inlined_call_operand.hbm [shape: bf16[128,1536], index: 1, kind: input, shape index: {}]
  %s2 = inlined_call_operand.hbm [shape: bf16[128,1536], index: 2, kind: output, shape index: {}]
  %s3 = sld [smem:[#allocation0]]
  $region57: #{tpu_custom_call.1} parent=0
    _
  %s5 = ssub.s32 1, %s3
  %s6 = scalar_select 0, %s5, %s3
  $region1: #{tpu_custom_call.1} parent=0
    #allocation3 [shape = 'u8[32768]{0}', space=vmem, size = 0x8000, scoped, tag = 'input window, operand 0, single buffered']
    #allocation4 [shape = 's32[2]{0}', space=sflag, size = 0x8, scoped, tag = 'scoped memory for tpu_custom_call.1']
    #allocation5 [shape = 's32[2]{0}', space=sflag, size = 0x8, scoped, tag = 'scoped memory for tpu_custom_call.1']
    #allocation6 [shape = 'u8[262144]{0}', space=vmem, size = 0x40000, scoped, tag = 'input window, operand 1']
    #allocation7 [shape = 's32[2]{0}', space=sflag, size = 0x8, scoped, tag = 'scoped memory for tpu_custom_call.1']
    #allocation8 [shape = 'u8[262144]{0}', space=vmem, size = 0x40000, scoped, tag = 'output window, operand 0']
    %7 = vsyncpa [#allocation4], 0
    %8 = vsyncpa [#allocation7], 0
    %s9 = scalar_lea.sflag [#allocation7], 1
    %10 = vsyncpa %s9, 0
    %11 = vsyncpa [#allocation5], 0
    %s12 = scalar_lea.sflag [#allocation5], 1
    %13 = vsyncpa %s12, 0
    loop: start=0, step=1, limit=5
    $region2: #{tpu_custom_call.1} parent=1 // loop_pre_header
      _
    $region3: #{tpu_custom_call.1} parent=1 // loop_header
      %s15 = sphi 0, %s19
      %p16 = scmp.ge.s32.totalorder %s15, 5
      %s22 = sphi 0, %s41
      %s23 = sphi 0, %s37
      %s24 = sphi 0, %s33
      %s25 = sphi 0, %s22
      %s26 = sphi 0, %s23
      %s27 = sphi 0, %s24
      %s28 = sphi 0, %s25
      %s29 = sphi 0, %s26
      %s30 = sphi 0, %s27
      %s46 = sphi 0, %s48
      %s49 = sphi 0, %s46
      %s50 = sphi 0, %s49
      %s66 = sphi 0, %s50
      %s74 = sphi 0, %s76
      %s77 = sphi 0, %s74
      %s78 = sphi 0, %s77
      %s94 = sphi 0, %s78
      %s102 = sphi 0, %s104
      %s105 = sphi 0, %s102
      %s106 = sphi 0, %s105
      %s122 = sphi 0, %s106
    $region4: #{tpu_custom_call.1} parent=1 // loop_header_branch
      %18 = sbr.rel (%p16) target = $region8
    $region5: #{tpu_custom_call.1} parent=1 // loop_body
      %s20 = ssub.s32 %s15, 1
      %s21 = ssub.s32 %s15, 2
      %s31 = sadd.s32 1, %s24
      %p32 = scmp.ge.s32.totalorder %s31, 1
      %s33 = scalar_select %p32, 0, %s31
      %s34 = sadd.s32 1, %s23
      %s35 = scalar_select %p32, %s34, %s23
      %p36 = scmp.ge.s32.totalorder %s35, 3
      %s37 = scalar_select %p36, 0, %s35
      %s38 = sadd.s32 1, %s22
      %s39 = scalar_select %p36, %s38, %s22
      %p40 = scmp.ge.s32.totalorder %s39, 1
      %s41 = scalar_select %p40, 0, %s39
      %s42 = ssub.s32 %s22, %s41
      %s43 = ssub.s32 %s24, %s33
      %s44 = sor.u32 %s42, %s43
      %p45 = scmp.eq.s32.totalorder %s44, 0
      %s47 = sadd.s32 %s46, 1
      %s48 = scalar_select %p45, %s46, %s47
      %p51 = pneg %p45
      %p52 = scmp.eq.s32.totalorder %s15, 2
      %p53 = por %p51, %p52
      %p54 = scmp.ne.s32.totalorder %s46, %s49
      %p55 = scmp.eq.s32.totalorder %s15, 0
      %p56 = por %p54, %p55
      %p57 = scmp.ne.s32.totalorder %s46, %s49
      %p58 = scmp.eq.s32.totalorder %s20, 2
      %p59 = por %p57, %p58
      %p60 = scmp.ne.s32.totalorder %s49, %s50
      %p61 = scmp.eq.s32.totalorder %s20, 0
      %p62 = por %p60, %p61
      %p63 = scmp.ne.s32.totalorder %s49, %s50
      %p64 = scmp.eq.s32.totalorder %s21, 2
      %p65 = por %p63, %p64
      %p67 = scmp.ne.s32.totalorder %s50, %s66
      %p68 = scmp.eq.s32.totalorder %s21, 0
      %p69 = por %p67, %p68
      %s70 = ssub.s32 %s24, %s33
      %s71 = ssub.s32 %s23, %s37
      %s72 = sor.u32 %s70, %s71
      %p73 = scmp.eq.s32.totalorder %s72, 0
      %s75 = sadd.s32 %s74, 1
      %s76 = scalar_select %p73, %s74, %s75
      %p79 = pneg %p73
      %p80 = scmp.eq.s32.totalorder %s15, 2
      %p81 = por %p79, %p80
      %p82 = scmp.ne.s32.totalorder %s74, %s77
      %p83 = scmp.eq.s32.totalorder %s15, 0
      %p84 = por %p82, %p83
      %p85 = scmp.ne.s32.totalorder %s74, %s77
      %p86 = scmp.eq.s32.totalorder %s20, 2
      %p87 = por %p85, %p86
      %p88 = scmp.ne.s32.totalorder %s77, %s78
      %p89 = scmp.eq.s32.totalorder %s20, 0
      %p90 = por %p88, %p89
      %p91 = scmp.ne.s32.totalorder %s77, %s78
      %p92 = scmp.eq.s32.totalorder %s21, 2
      %p93 = por %p91, %p92
      %p95 = scmp.ne.s32.totalorder %s78, %s94
      %p96 = scmp.eq.s32.totalorder %s21, 0
      %p97 = por %p95, %p96
      %s98 = ssub.s32 %s22, %s41
      %s99 = ssub.s32 %s23, %s37
      %s100 = sor.u32 %s98, %s99
      %p101 = scmp.eq.s32.totalorder %s100, 0
      %s103 = sadd.s32 %s102, 1
      %s104 = scalar_select %p101, %s102, %s103
      %p107 = pneg %p101
      %p108 = scmp.eq.s32.totalorder %s15, 2
      %p109 = por %p107, %p108
      %p110 = scmp.ne.s32.totalorder %s102, %s105
      %p111 = scmp.eq.s32.totalorder %s15, 0
      %p112 = por %p110, %p111
      %p113 = scmp.ne.s32.totalorder %s102, %s105
      %p114 = scmp.eq.s32.totalorder %s20, 2
      %p115 = por %p113, %p114
      %p116 = scmp.ne.s32.totalorder %s105, %s106
      %p117 = scmp.eq.s32.totalorder %s20, 0
      %p118 = por %p116, %p117
      %p119 = scmp.ne.s32.totalorder %s105, %s106
      %p120 = scmp.eq.s32.totalorder %s21, 2
      %p121 = por %p119, %p120
      %p123 = scmp.ne.s32.totalorder %s106, %s122
      %p124 = scmp.eq.s32.totalorder %s21, 0
      %p125 = por %p123, %p124
      %p126 = scmp.le.s32.totalorder 1, %s15
      %p127 = scmp.lt.s32.totalorder %s15, 4
      %p128 = pnand %p126, %p127
      %p129 = pneg %p128
      // Predicated region
      $region9: #{tpu_custom_call.1} parent=5 // pred_check
        _
      $region10: #{tpu_custom_call.1} parent=5 // pred_check_branch
        %131 = sbr.rel (%p128) target = $region12
      $region11: #{tpu_custom_call.1} parent=5 // pred_region
        %s132 = ssub.s32 %s15, 1
        // Predicated region
        $region13: #{tpu_custom_call.1} parent=11 // pred_check
          %p133 = pneg %p62
        $region14: #{tpu_custom_call.1} parent=11 // pred_check_branch
          %135 = sbr.rel (%p133) target = $region16
        $region15: #{tpu_custom_call.1} parent=11 // pred_region
          %s136 = smul.u32 16, %s25
          %s138 = ssub.s32 1024, 1024
          %139 = vsyncadd [#allocation4], %s138
          %s140 = sadd.s32 %s27, %s136
          %s141 = smul.addr %s140, 64
          %s142 = scalar_lea.hbm %s0, %s141
          %s143 = sshll.u32 [#allocation3], 4
          %s144 = int_to_ptr.vmem [resolvable:$true] %s143
          %149 = dma.hbm_to_vmem [thread:$0]  %s142, 1024, %s144, [#allocation4], 64, 64, 4
        $region16: #{tpu_custom_call.1} parent=11 // pred_fallthru
          _
      $region12: #{tpu_custom_call.1} parent=5 // pred_fallthru
        _
      %p150 = scmp.lt.s32.totalorder %s15, 3
      // Predicated region
      $region17: #{tpu_custom_call.1} parent=5 // pred_check
        %p151 = pneg %p150
      $region18: #{tpu_custom_call.1} parent=5 // pred_check_branch
        %153 = sbr.rel (%p151) target = $region20
      $region19: #{tpu_custom_call.1} parent=5 // pred_region
        // Predicated region
        $region21: #{tpu_custom_call.1} parent=19 // pred_check
          %p154 = pneg %p84
        $region22: #{tpu_custom_call.1} parent=19 // pred_check_branch
          %156 = sbr.rel (%p154) target = $region24
        $region23: #{tpu_custom_call.1} parent=19 // pred_region
          %s157 = sand.u32 %s74, 1
          %s158 = scalar_lea.sflag [#allocation7], %s157
          %s159 = sand.u32 %s74, 1
          %s160 = smul.addr %s159, 256
          %s161 = scalar_lea.vmem [#allocation6], %s160
          %s162 = smul.u32 16, %s24
          %s163 = smul.u32 4, %s23
          %s165 = ssub.s32 4096, 4096
          %166 = vsyncadd %s158, %s165
          %s167 = smul.addr %s162, 12
          %s168 = sadd.s32 %s163, %s167
          %s169 = smul.addr %s168, 64
          %s170 = scalar_lea.hbm %s1, %s169
          %s171 = sshll.u32 %s161, 4
          %s172 = int_to_ptr.vmem [resolvable:$true] %s171
          %177 = dma.hbm_to_vmem [thread:$0]  %s170, 4096, %s172, %s158, 768, 256, 16
        $region24: #{tpu_custom_call.1} parent=19 // pred_fallthru
          _
      $region20: #{tpu_custom_call.1} parent=5 // pred_fallthru
        _
      %p178 = scmp.le.s32.totalorder 1, %s15
      %p179 = scmp.lt.s32.totalorder %s15, 4
      %p180 = pnand %p178, %p179
      %p181 = pneg %p180
      // Predicated region
      $region25: #{tpu_custom_call.1} parent=5 // pred_check
        _
      $region26: #{tpu_custom_call.1} parent=5 // pred_check_branch
        %183 = sbr.rel (%p180) target = $region28
      $region27: #{tpu_custom_call.1} parent=5 // pred_region
        %s184 = ssub.s32 %s15, 1
        // Predicated region
        $region29: #{tpu_custom_call.1} parent=27 // pred_check
          %p185 = pneg %p62
        $region30: #{tpu_custom_call.1} parent=27 // pred_check_branch
          %187 = sbr.rel (%p185) target = $region32
        $region31: #{tpu_custom_call.1} parent=27 // pred_region
          %188 = dma.done [#allocation4], 1024
        $region32: #{tpu_custom_call.1} parent=27 // pred_fallthru
          _
        %s189 = sand.u32 %s77, 1
        %s190 = scalar_lea.sflag [#allocation7], %s189
        %s191 = sand.u32 %s77, 1
        %s192 = smul.addr %s191, 256
        %s193 = scalar_lea.vmem [#allocation6], %s192
        // Predicated region
        $region33: #{tpu_custom_call.1} parent=27 // pred_check
          %p194 = pneg %p90
        $region34: #{tpu_custom_call.1} parent=27 // pred_check_branch
          %196 = sbr.rel (%p194) target = $region36
        $region35: #{tpu_custom_call.1} parent=27 // pred_region
          %197 = dma.done %s190, 4096
        $region36: #{tpu_custom_call.1} parent=27 // pred_fallthru
          _
        %p198 = pneg %p62
        %p199 = pneg %p59
        %s200 = sand.u32 %s77, 1
        %s201 = scalar_lea.sflag [#allocation7], %s200
        %s202 = sand.u32 %s77, 1
        %s203 = smul.addr %s202, 256
        %s204 = scalar_lea.vmem [#allocation6], %s203
        %p205 = pneg %p90
        %p206 = pneg %p87
        %p207 = pneg %p118
        %p208 = pneg %p115
        %s209 = sand.u32 %s105, 1
        %s210 = scalar_lea.sflag [#allocation5], %s209
        %s211 = sand.u32 %s105, 1
        %s212 = smul.addr %s211, 256
        %s213 = scalar_lea.vmem [#allocation8], %s212
        %s214 = smul.u32 16, %s25
        %s215 = smul.u32 16, %s27
        %s216 = smul.u32 4, %s26
        %s217 = smul.u32 16, %s25
        %s218 = smul.u32 4, %s26
        %p220 = scmp.eq.s32.totalorder %s27, 0
        // Predicated region
        $region37: #{tpu_custom_call.1} parent=27 // pred_check
          %p221 = pneg %p220
        $region38: #{tpu_custom_call.1} parent=27 // pred_check_branch
          %223 = sbr.rel (%p221) target = $region40
        $region39: #{tpu_custom_call.1} parent=27 // pred_region
          %224 = vst [vmem:[#allocation2] sm:$0xff] 0.0
          %225 = vst [vmem:[#allocation2 + $0x8] sm:$0xff] 0.0
          %226 = vst [vmem:[#allocation2 + $0x10] sm:$0xff] 0.0
          %227 = vst [vmem:[#allocation2 + $0x18] sm:$0xff] 0.0
          %228 = vst [vmem:[#allocation2 + $0x20] sm:$0xff] 0.0
          %229 = vst [vmem:[#allocation2 + $0x28] sm:$0xff] 0.0
          %230 = vst [vmem:[#allocation2 + $0x30] sm:$0xff] 0.0
          %231 = vst [vmem:[#allocation2 + $0x38] sm:$0xff] 0.0
          %232 = vst [vmem:[#allocation2 + $0x40] sm:$0xff] 0.0
          %233 = vst [vmem:[#allocation2 + $0x48] sm:$0xff] 0.0
          %234 = vst [vmem:[#allocation2 + $0x50] sm:$0xff] 0.0
          %235 = vst [vmem:[#allocation2 + $0x58] sm:$0xff] 0.0
          %236 = vst [vmem:[#allocation2 + $0x60] sm:$0xff] 0.0
          %237 = vst [vmem:[#allocation2 + $0x68] sm:$0xff] 0.0
          %238 = vst [vmem:[#allocation2 + $0x70] sm:$0xff] 0.0
          %239 = vst [vmem:[#allocation2 + $0x78] sm:$0xff] 0.0
          %240 = vst [vmem:[#allocation2 + $0x80] sm:$0xff] 0.0
          %241 = vst [vmem:[#allocation2 + $0x88] sm:$0xff] 0.0
          %242 = vst [vmem:[#allocation2 + $0x90] sm:$0xff] 0.0
          %243 = vst [vmem:[#allocation2 + $0x98] sm:$0xff] 0.0
          %244 = vst [vmem:[#allocation2 + $0xa0] sm:$0xff] 0.0
          %245 = vst [vmem:[#allocation2 + $0xa8] sm:$0xff] 0.0
          %246 = vst [vmem:[#allocation2 + $0xb0] sm:$0xff] 0.0
          %247 = vst [vmem:[#allocation2 + $0xb8] sm:$0xff] 0.0
          %248 = vst [vmem:[#allocation2 + $0xc0] sm:$0xff] 0.0
          %249 = vst [vmem:[#allocation2 + $0xc8] sm:$0xff] 0.0
          %250 = vst [vmem:[#allocation2 + $0xd0] sm:$0xff] 0.0
          %251 = vst [vmem:[#allocation2 + $0xd8] sm:$0xff] 0.0
          %252 = vst [vmem:[#allocation2 + $0xe0] sm:$0xff] 0.0
          %253 = vst [vmem:[#allocation2 + $0xe8] sm:$0xff] 0.0
          %254 = vst [vmem:[#allocation2 + $0xf0] sm:$0xff] 0.0
          %255 = vst [vmem:[#allocation2 + $0xf8] sm:$0xff] 0.0
          %256 = vst [vmem:[#allocation2 + $0x100] sm:$0xff] 0.0
          %257 = vst [vmem:[#allocation2 + $0x108] sm:$0xff] 0.0
          %258 = vst [vmem:[#allocation2 + $0x110] sm:$0xff] 0.0
          %259 = vst [vmem:[#allocation2 + $0x118] sm:$0xff] 0.0
          %260 = vst [vmem:[#allocation2 + $0x120] sm:$0xff] 0.0
          %261 = vst [vmem:[#allocation2 + $0x128] sm:$0xff] 0.0
          %262 = vst [vmem:[#allocation2 + $0x130] sm:$0xff] 0.0
          %263 = vst [vmem:[#allocation2 + $0x138] sm:$0xff] 0.0
          %264 = vst [vmem:[#allocation2 + $0x140] sm:$0xff] 0.0
          %265 = vst [vmem:[#allocation2 + $0x148] sm:$0xff] 0.0
          %266 = vst [vmem:[#allocation2 + $0x150] sm:$0xff] 0.0
          %267 = vst [vmem:[#allocation2 + $0x158] sm:$0xff] 0.0
          %268 = vst [vmem:[#allocation2 + $0x160] sm:$0xff] 0.0
          %269 = vst [vmem:[#allocation2 + $0x168] sm:$0xff] 0.0
          %270 = vst [vmem:[#allocation2 + $0x170] sm:$0xff] 0.0
          %271 = vst [vmem:[#allocation2 + $0x178] sm:$0xff] 0.0
          %272 = vst [vmem:[#allocation2 + $0x180] sm:$0xff] 0.0
          %273 = vst [vmem:[#allocation2 + $0x188] sm:$0xff] 0.0
          %274 = vst [vmem:[#allocation2 + $0x190] sm:$0xff] 0.0
          %275 = vst [vmem:[#allocation2 + $0x198] sm:$0xff] 0.0
          %276 = vst [vmem:[#allocation2 + $0x1a0] sm:$0xff] 0.0
          %277 = vst [vmem:[#allocation2 + $0x1a8] sm:$0xff] 0.0
          %278 = vst [vmem:[#allocation2 + $0x1b0] sm:$0xff] 0.0
          %279 = vst [vmem:[#allocation2 + $0x1b8] sm:$0xff] 0.0
          %280 = vst [vmem:[#allocation2 + $0x1c0] sm:$0xff] 0.0
          %281 = vst [vmem:[#allocation2 + $0x1c8] sm:$0xff] 0.0
          %282 = vst [vmem:[#allocation2 + $0x1d0] sm:$0xff] 0.0
          %283 = vst [vmem:[#allocation2 + $0x1d8] sm:$0xff] 0.0
          %284 = vst [vmem:[#allocation2 + $0x1e0] sm:$0xff] 0.0
          %285 = vst [vmem:[#allocation2 + $0x1e8] sm:$0xff] 0.0
          %286 = vst [vmem:[#allocation2 + $0x1f0] sm:$0xff] 0.0
          %287 = vst [vmem:[#allocation2 + $0x1f8] sm:$0xff] 0.0
        $region40: #{tpu_custom_call.1} parent=27 // pred_fallthru
          _
        %v288 = vld [vmem:[#allocation2] sm:$0xff]
        %v289 = vld [vmem:[#allocation2 + $0x8] sm:$0xff]
        %v290 = vld [vmem:[#allocation2 + $0x10] sm:$0xff]
        %v291 = vld [vmem:[#allocation2 + $0x18] sm:$0xff]
        %v292 = vld [vmem:[#allocation2 + $0x20] sm:$0xff]
        %v293 = vld [vmem:[#allocation2 + $0x28] sm:$0xff]
        %v294 = vld [vmem:[#allocation2 + $0x30] sm:$0xff]
        %v295 = vld [vmem:[#allocation2 + $0x38] sm:$0xff]
        %v296 = vld [vmem:[#allocation2 + $0x40] sm:$0xff]
        %v297 = vld [vmem:[#allocation2 + $0x48] sm:$0xff]
        %v298 = vld [vmem:[#allocation2 + $0x50] sm:$0xff]
        %v299 = vld [vmem:[#allocation2 + $0x58] sm:$0xff]
        %v300 = vld [vmem:[#allocation2 + $0x60] sm:$0xff]
        %v301 = vld [vmem:[#allocation2 + $0x68] sm:$0xff]
        %v302 = vld [vmem:[#allocation2 + $0x70] sm:$0xff]
        %v303 = vld [vmem:[#allocation2 + $0x78] sm:$0xff]
        %v304 = vld [vmem:[#allocation2 + $0x80] sm:$0xff]
        %v305 = vld [vmem:[#allocation2 + $0x88] sm:$0xff]
        %v306 = vld [vmem:[#allocation2 + $0x90] sm:$0xff]
        %v307 = vld [vmem:[#allocation2 + $0x98] sm:$0xff]
        %v308 = vld [vmem:[#allocation2 + $0xa0] sm:$0xff]
        %v309 = vld [vmem:[#allocation2 + $0xa8] sm:$0xff]
        %v310 = vld [vmem:[#allocation2 + $0xb0] sm:$0xff]
        %v311 = vld [vmem:[#allocation2 + $0xb8] sm:$0xff]
        %v312 = vld [vmem:[#allocation2 + $0xc0] sm:$0xff]
        %v313 = vld [vmem:[#allocation2 + $0xc8] sm:$0xff]
        %v314 = vld [vmem:[#allocation2 + $0xd0] sm:$0xff]
        %v315 = vld [vmem:[#allocation2 + $0xd8] sm:$0xff]
        %v316 = vld [vmem:[#allocation2 + $0xe0] sm:$0xff]
        %v317 = vld [vmem:[#allocation2 + $0xe8] sm:$0xff]
        %v318 = vld [vmem:[#allocation2 + $0xf0] sm:$0xff]
        %v319 = vld [vmem:[#allocation2 + $0xf8] sm:$0xff]
        %v320 = vld [vmem:[#allocation2 + $0x100] sm:$0xff]
        %v321 = vld [vmem:[#allocation2 + $0x108] sm:$0xff]
        %v322 = vld [vmem:[#allocation2 + $0x110] sm:$0xff]
        %v323 = vld [vmem:[#allocation2 + $0x118] sm:$0xff]
        %v324 = vld [vmem:[#allocation2 + $0x120] sm:$0xff]
        %v325 = vld [vmem:[#allocation2 + $0x128] sm:$0xff]
        %v326 = vld [vmem:[#allocation2 + $0x130] sm:$0xff]
        %v327 = vld [vmem:[#allocation2 + $0x138] sm:$0xff]
        %v328 = vld [vmem:[#allocation2 + $0x140] sm:$0xff]
        %v329 = vld [vmem:[#allocation2 + $0x148] sm:$0xff]
        %v330 = vld [vmem:[#allocation2 + $0x150] sm:$0xff]
        %v331 = vld [vmem:[#allocation2 + $0x158] sm:$0xff]
        %v332 = vld [vmem:[#allocation2 + $0x160] sm:$0xff]
        %v333 = vld [vmem:[#allocation2 + $0x168] sm:$0xff]
        %v334 = vld [vmem:[#allocation2 + $0x170] sm:$0xff]
        %v335 = vld [vmem:[#allocation2 + $0x178] sm:$0xff]
        %v336 = vld [vmem:[#allocation2 + $0x180] sm:$0xff]
        %v337 = vld [vmem:[#allocation2 + $0x188] sm:$0xff]
        %v338 = vld [vmem:[#allocation2 + $0x190] sm:$0xff]
        %v339 = vld [vmem:[#allocation2 + $0x198] sm:$0xff]
        %v340 = vld [vmem:[#allocation2 + $0x1a0] sm:$0xff]
        %v341 = vld [vmem:[#allocation2 + $0x1a8] sm:$0xff]
        %v342 = vld [vmem:[#allocation2 + $0x1b0] sm:$0xff]
        %v343 = vld [vmem:[#allocation2 + $0x1b8] sm:$0xff]
        %v344 = vld [vmem:[#allocation2 + $0x1c0] sm:$0xff]
        %v345 = vld [vmem:[#allocation2 + $0x1c8] sm:$0xff]
        %v346 = vld [vmem:[#allocation2 + $0x1d0] sm:$0xff]
        %v347 = vld [vmem:[#allocation2 + $0x1d8] sm:$0xff]
        %v348 = vld [vmem:[#allocation2 + $0x1e0] sm:$0xff]
        %v349 = vld [vmem:[#allocation2 + $0x1e8] sm:$0xff]
        %v350 = vld [vmem:[#allocation2 + $0x1f0] sm:$0xff]
        %v351 = vld [vmem:[#allocation2 + $0x1f8] sm:$0xff]
        %v352 = vld [vmem:[#allocation3] sm:$0xf]
        %v353 = vld [vmem:[#allocation3 + $0x4] sm:$0xf]
        %v354 = vld [vmem:[#allocation3 + $0x8] sm:$0xf]
        %v355 = vld [vmem:[#allocation3 + $0xc] sm:$0xf]
        %v356 = vld [vmem:[#allocation3 + $0x10] sm:$0xf]
        %v357 = vld [vmem:[#allocation3 + $0x14] sm:$0xf]
        %v358 = vld [vmem:[#allocation3 + $0x18] sm:$0xf]
        %v359 = vld [vmem:[#allocation3 + $0x1c] sm:$0xf]
        %v360 = vld [vmem:[#allocation3 + $0x20] sm:$0xf]
        %v361 = vld [vmem:[#allocation3 + $0x24] sm:$0xf]
        %v362 = vld [vmem:[#allocation3 + $0x28] sm:$0xf]
        %v363 = vld [vmem:[#allocation3 + $0x2c] sm:$0xf]
        %v364 = vld [vmem:[#allocation3 + $0x30] sm:$0xf]
        %v365 = vld [vmem:[#allocation3 + $0x34] sm:$0xf]
        %v366 = vld [vmem:[#allocation3 + $0x38] sm:$0xf]
        %v367 = vld [vmem:[#allocation3 + $0x3c] sm:$0xf]
        %v368 = vld [vmem:[%s193] sm:$0xff]
        %v369 = vld [vmem:[%s193 + $0x8] sm:$0xff]
        %v370 = vld [vmem:[%s193 + $0x10] sm:$0xff]
        %v371 = vld [vmem:[%s193 + $0x18] sm:$0xff]
        %v372 = vld [vmem:[%s193 + $0x20] sm:$0xff]
        %v373 = vld [vmem:[%s193 + $0x28] sm:$0xff]
        %v374 = vld [vmem:[%s193 + $0x30] sm:$0xff]
        %v375 = vld [vmem:[%s193 + $0x38] sm:$0xff]
        %v376 = vld [vmem:[%s193 + $0x40] sm:$0xff]
        %v377 = vld [vmem:[%s193 + $0x48] sm:$0xff]
        %v378 = vld [vmem:[%s193 + $0x50] sm:$0xff]
        %v379 = vld [vmem:[%s193 + $0x58] sm:$0xff]
        %v380 = vld [vmem:[%s193 + $0x60] sm:$0xff]
        %v381 = vld [vmem:[%s193 + $0x68] sm:$0xff]
        %v382 = vld [vmem:[%s193 + $0x70] sm:$0xff]
        %v383 = vld [vmem:[%s193 + $0x78] sm:$0xff]
        %v384 = vld [vmem:[%s193 + $0x80] sm:$0xff]
        %v385 = vld [vmem:[%s193 + $0x88] sm:$0xff]
        %v386 = vld [vmem:[%s193 + $0x90] sm:$0xff]
        %v387 = vld [vmem:[%s193 + $0x98] sm:$0xff]
        %v388 = vld [vmem:[%s193 + $0xa0] sm:$0xff]
        %v389 = vld [vmem:[%s193 + $0xa8] sm:$0xff]
        %v390 = vld [vmem:[%s193 + $0xb0] sm:$0xff]
        %v391 = vld [vmem:[%s193 + $0xb8] sm:$0xff]
        %v392 = vld [vmem:[%s193 + $0xc0] sm:$0xff]
        %v393 = vld [vmem:[%s193 + $0xc8] sm:$0xff]
        %v394 = vld [vmem:[%s193 + $0xd0] sm:$0xff]
        %v395 = vld [vmem:[%s193 + $0xd8] sm:$0xff]
        %v396 = vld [vmem:[%s193 + $0xe0] sm:$0xff]
        %v397 = vld [vmem:[%s193 + $0xe8] sm:$0xff]
        %v398 = vld [vmem:[%s193 + $0xf0] sm:$0xff]
        %v399 = vld [vmem:[%s193 + $0xf8] sm:$0xff]
        %v416 = vunpack.c.l.b16 %v352
        %v417 = vunpack.c.l.b16 %v353
        %v418 = vunpack.c.l.b16 %v354
        %v419 = vunpack.c.l.b16 %v355
        %v420 = vunpack.c.l.b16 %v356
        %v421 = vunpack.c.l.b16 %v357
        %v422 = vunpack.c.l.b16 %v358
        %v423 = vunpack.c.l.b16 %v359
        %v424 = vunpack.c.l.b16 %v360
        %v425 = vunpack.c.l.b16 %v361
        %v426 = vunpack.c.l.b16 %v362
        %v427 = vunpack.c.l.b16 %v363
        %v428 = vunpack.c.l.b16 %v364
        %v429 = vunpack.c.l.b16 %v365
        %v430 = vunpack.c.l.b16 %v366
        %v431 = vunpack.c.l.b16 %v367
        %v432 = vpack.c.b16 %v417, %v416
        %v433 = vpack.c.b16 %v419, %v418
        %v434 = vpack.c.b16 %v421, %v420
        %v435 = vpack.c.b16 %v423, %v422
        %v436 = vpack.c.b16 %v425, %v424
        %v437 = vpack.c.b16 %v427, %v426
        %v438 = vpack.c.b16 %v429, %v428
        %v439 = vpack.c.b16 %v431, %v430
        %v480 = vunpack.c.l.b16 %v368
        %v481 = vunpack.c.h.b16 %v368
        %v482 = vunpack.c.l.b16 %v369
        %v483 = vunpack.c.h.b16 %v369
        %v484 = vunpack.c.l.b16 %v370
        %v485 = vunpack.c.h.b16 %v370
        %v486 = vunpack.c.l.b16 %v371
        %v487 = vunpack.c.h.b16 %v371
        %v488 = vunpack.c.l.b16 %v372
        %v489 = vunpack.c.h.b16 %v372
        %v490 = vunpack.c.l.b16 %v373
        %v491 = vunpack.c.h.b16 %v373
        %v492 = vunpack.c.l.b16 %v374
        %v493 = vunpack.c.h.b16 %v374
        %v494 = vunpack.c.l.b16 %v375
        %v495 = vunpack.c.h.b16 %v375
        %v496 = vunpack.c.l.b16 %v376
        %v497 = vunpack.c.h.b16 %v376
        %v498 = vunpack.c.l.b16 %v377
        %v499 = vunpack.c.h.b16 %v377
        %v500 = vunpack.c.l.b16 %v378
        %v501 = vunpack.c.h.b16 %v378
        %v502 = vunpack.c.l.b16 %v379
        %v503 = vunpack.c.h.b16 %v379
        %v504 = vunpack.c.l.b16 %v380
        %v505 = vunpack.c.h.b16 %v380
        %v506 = vunpack.c.l.b16 %v381
        %v507 = vunpack.c.h.b16 %v381
        %v508 = vunpack.c.l.b16 %v382
        %v509 = vunpack.c.h.b16 %v382
        %v510 = vunpack.c.l.b16 %v383
        %v511 = vunpack.c.h.b16 %v383
        %v512 = vunpack.c.l.b16 %v384
        %v513 = vunpack.c.h.b16 %v384
        %v514 = vunpack.c.l.b16 %v385
        %v515 = vunpack.c.h.b16 %v385
        %v516 = vunpack.c.l.b16 %v386
        %v517 = vunpack.c.h.b16 %v386
        %v518 = vunpack.c.l.b16 %v387
        %v519 = vunpack.c.h.b16 %v387
        %v520 = vunpack.c.l.b16 %v388
        %v521 = vunpack.c.h.b16 %v388
        %v522 = vunpack.c.l.b16 %v389
        %v523 = vunpack.c.h.b16 %v389
        %v524 = vunpack.c.l.b16 %v390
        %v525 = vunpack.c.h.b16 %v390
        %v526 = vunpack.c.l.b16 %v391
        %v527 = vunpack.c.h.b16 %v391
        %v528 = vunpack.c.l.b16 %v392
        %v529 = vunpack.c.h.b16 %v392
        %v530 = vunpack.c.l.b16 %v393
        %v531 = vunpack.c.h.b16 %v393
        %v532 = vunpack.c.l.b16 %v394
        %v533 = vunpack.c.h.b16 %v394
        %v534 = vunpack.c.l.b16 %v395
        %v535 = vunpack.c.h.b16 %v395
        %v536 = vunpack.c.l.b16 %v396
        %v537 = vunpack.c.h.b16 %v396
        %v538 = vunpack.c.l.b16 %v397
        %v539 = vunpack.c.h.b16 %v397
        %v540 = vunpack.c.l.b16 %v398
        %v541 = vunpack.c.h.b16 %v398
        %v542 = vunpack.c.l.b16 %v399
        %v543 = vunpack.c.h.b16 %v399
        %v544 = vpack.c.b16 %v484, %v480
        %v545 = vpack.c.b16 %v485, %v481
        %v546 = vpack.c.b16 %v486, %v482
        %v547 = vpack.c.b16 %v487, %v483
        %v548 = vpack.c.b16 %v492, %v488
        %v549 = vpack.c.b16 %v493, %v489
        %v550 = vpack.c.b16 %v494, %v490
        %v551 = vpack.c.b16 %v495, %v491
        %v552 = vpack.c.b16 %v500, %v496
        %v553 = vpack.c.b16 %v501, %v497
        %v554 = vpack.c.b16 %v502, %v498
        %v555 = vpack.c.b16 %v503, %v499
        %v556 = vpack.c.b16 %v508, %v504
        %v557 = vpack.c.b16 %v509, %v505
        %v558 = vpack.c.b16 %v510, %v506
        %v559 = vpack.c.b16 %v511, %v507
        %v560 = vpack.c.b16 %v516, %v512
        %v561 = vpack.c.b16 %v517, %v513
        %v562 = vpack.c.b16 %v518, %v514
        %v563 = vpack.c.b16 %v519, %v515
        %v564 = vpack.c.b16 %v524, %v520
        %v565 = vpack.c.b16 %v525, %v521
        %v566 = vpack.c.b16 %v526, %v522
        %v567 = vpack.c.b16 %v527, %v523
        %v568 = vpack.c.b16 %v532, %v528
        %v569 = vpack.c.b16 %v533, %v529
        %v570 = vpack.c.b16 %v534, %v530
        %v571 = vpack.c.b16 %v535, %v531
        %v572 = vpack.c.b16 %v540, %v536
        %v573 = vpack.c.b16 %v541, %v537
        %v574 = vpack.c.b16 %v542, %v538
        %v575 = vpack.c.b16 %v543, %v539
        %608 = vmatprep.subr.bf16.mxu0 %v545
        %609 = vmatpush1.bf16.msra.mxu0 %v544
        %610 = vmatprep.subr.bf16.mxu0 %v549
        %611 = vmatpush1.bf16.msra.mxu0 %v548
        %612 = vmatprep.subr.bf16.mxu0 %v553
        %613 = vmatpush1.bf16.msra.mxu0 %v552
        %614 = vmatprep.subr.bf16.mxu0 %v557
        %615 = vmatpush1.bf16.msra.mxu0 %v556
        %616 = vmatprep.subr.bf16.mxu0 %v561
        %617 = vmatpush1.bf16.msra.mxu0 %v560
        %618 = vmatprep.subr.bf16.mxu0 %v565
        %619 = vmatpush1.bf16.msra.mxu0 %v564
        %620 = vmatprep.subr.bf16.mxu0 %v569
        %621 = vmatpush1.bf16.msra.mxu0 %v568
        %622 = vmatprep.subr.bf16.mxu0 %v573
        %623 = vmatpush1.bf16.msra.mxu0 %v572
        %624 = vmatprep.subr.bf16.mxu0 0
        %625 = vmatpush1.bf16.msra.mxu0 0
        %626 = vmatprep.subr.bf16.mxu0 0
        %627 = vmatpush1.bf16.msra.mxu0 0
        %628 = vmatprep.subr.bf16.mxu0 0
        %629 = vmatpush1.bf16.msra.mxu0 0
        %630 = vmatprep.subr.bf16.mxu0 0
        %631 = vmatpush1.bf16.msra.mxu0 0
        %632 = vmatprep.subr.bf16.mxu0 0
        %633 = vmatpush1.bf16.msra.mxu0 0
        %634 = vmatprep.subr.bf16.mxu0 0
        %635 = vmatpush1.bf16.msra.mxu0 0
        %636 = vmatprep.subr.bf16.mxu0 0
        %637 = vmatpush1.bf16.msra.mxu0 0
        %638 = vmatprep.subr.bf16.mxu0 0
        %639 = vmatpush1.bf16.msra.mxu0 0
        %640 = vmatprep.mubr.bf16.mxu0 0
        %641 = vmatmul.mubr.bf16.gmra.mrb[0].mxu0 %v432
        %v642 = vpop.f32.mrb[0].mxu0
        %v643 = vadd.f32 0.0, %v642
        %v644 = vpop.f32.mrb[0].mxu0
        %v645 = vadd.f32 0.0, %v644
        %v646 = vpop.f32.mrb[0].mxu0
        %v647 = vadd.f32 0.0, %v646
        %v648 = vpop.f32.mrb[0].mxu0
        %v649 = vadd.f32 0.0, %v648
        %650 = vmatprep.mubr.bf16.mxu0 0
        %651 = vmatmul.mubr.bf16.gmra.mrb[0].mxu0 %v433
        %v652 = vpop.f32.mrb[0].mxu0
        %v653 = vadd.f32 0.0, %v652
        %v654 = vpop.f32.mrb[0].mxu0
        %v655 = vadd.f32 0.0, %v654
        %v656 = vpop.f32.mrb[0].mxu0
        %v657 = vadd.f32 0.0, %v656
        %v658 = vpop.f32.mrb[0].mxu0
        %v659 = vadd.f32 0.0, %v658
        %660 = vmatprep.mubr.bf16.mxu0 0
        %661 = vmatmul.mubr.bf16.gmra.mrb[0].mxu0 %v434
        %v662 = vpop.f32.mrb[0].mxu0
        %v663 = vadd.f32 0.0, %v662
        %v664 = vpop.f32.mrb[0].mxu0
        %v665 = vadd.f32 0.0, %v664
        %v666 = vpop.f32.mrb[0].mxu0
        %v667 = vadd.f32 0.0, %v666
        %v668 = vpop.f32.mrb[0].mxu0
        %v669 = vadd.f32 0.0, %v668
        %670 = vmatprep.mubr.bf16.mxu0 0
        %671 = vmatmul.mubr.bf16.gmra.mrb[0].mxu0 %v435
        %v672 = vpop.f32.mrb[0].mxu0
        %v673 = vadd.f32 0.0, %v672
        %v674 = vpop.f32.mrb[0].mxu0
        %v675 = vadd.f32 0.0, %v674
        %v676 = vpop.f32.mrb[0].mxu0
        %v677 = vadd.f32 0.0, %v676
        %v678 = vpop.f32.mrb[0].mxu0
        %v679 = vadd.f32 0.0, %v678
        %680 = vmatprep.mubr.bf16.mxu0 0
        %681 = vmatmul.mubr.bf16.gmra.mrb[0].mxu0 %v436
        %v682 = vpop.f32.mrb[0].mxu0
        %v683 = vadd.f32 0.0, %v682
        %v684 = vpop.f32.mrb[0].mxu0
        %v685 = vadd.f32 0.0, %v684
        %v686 = vpop.f32.mrb[0].mxu0
        %v687 = vadd.f32 0.0, %v686
        %v688 = vpop.f32.mrb[0].mxu0
        %v689 = vadd.f32 0.0, %v688
        %690 = vmatprep.mubr.bf16.mxu0 0
        %691 = vmatmul.mubr.bf16.gmra.mrb[0].mxu0 %v437
        %v692 = vpop.f32.mrb[0].mxu0
        %v693 = vadd.f32 0.0, %v692
        %v694 = vpop.f32.mrb[0].mxu0
        %v695 = vadd.f32 0.0, %v694
        %v696 = vpop.f32.mrb[0].mxu0
        %v697 = vadd.f32 0.0, %v696
        %v698 = vpop.f32.mrb[0].mxu0
        %v699 = vadd.f32 0.0, %v698
        %700 = vmatprep.mubr.bf16.mxu0 0
        %701 = vmatmul.mubr.bf16.gmra.mrb[0].mxu0 %v438
        %v702 = vpop.f32.mrb[0].mxu0
        %v703 = vadd.f32 0.0, %v702
        %v704 = vpop.f32.mrb[0].mxu0
        %v705 = vadd.f32 0.0, %v704
        %v706 = vpop.f32.mrb[0].mxu0
        %v707 = vadd.f32 0.0, %v706
        %v708 = vpop.f32.mrb[0].mxu0
        %v709 = vadd.f32 0.0, %v708
        %710 = vmatprep.mubr.bf16.mxu0 0
        %711 = vmatmul.mubr.bf16.gmra.mrb[0].mxu0 %v439
        %v712 = vpop.f32.mrb[0].mxu0
        %v713 = vadd.f32 0.0, %v712
        %v714 = vpop.f32.mrb[0].mxu0
        %v715 = vadd.f32 0.0, %v714
        %v716 = vpop.f32.mrb[0].mxu0
        %v717 = vadd.f32 0.0, %v716
        %v718 = vpop.f32.mrb[0].mxu0
        %v719 = vadd.f32 0.0, %v718
        %720 = vdwg.mxu0
        %721 = vmatprep.subr.bf16.mxu0 %v547
        %722 = vmatpush1.bf16.msra.mxu0 %v546
        %723 = vmatprep.subr.bf16.mxu0 %v551
        %724 = vmatpush1.bf16.msra.mxu0 %v550
        %725 = vmatprep.subr.bf16.mxu0 %v555
        %726 = vmatpush1.bf16.msra.mxu0 %v554
        %727 = vmatprep.subr.bf16.mxu0 %v559
        %728 = vmatpush1.bf16.msra.mxu0 %v558
        %729 = vmatprep.subr.bf16.mxu0 %v563
        %730 = vmatpush1.bf16.msra.mxu0 %v562
        %731 = vmatprep.subr.bf16.mxu0 %v567
        %732 = vmatpush1.bf16.msra.mxu0 %v566
        %733 = vmatprep.subr.bf16.mxu0 %v571
        %734 = vmatpush1.bf16.msra.mxu0 %v570
        %735 = vmatprep.subr.bf16.mxu0 %v575
        %736 = vmatpush1.bf16.msra.mxu0 %v574
        %737 = vmatprep.subr.bf16.mxu0 0
        %738 = vmatpush1.bf16.msra.mxu0 0
        %739 = vmatprep.subr.bf16.mxu0 0
        %740 = vmatpush1.bf16.msra.mxu0 0
        %741 = vmatprep.subr.bf16.mxu0 0
        %742 = vmatpush1.bf16.msra.mxu0 0
        %743 = vmatprep.subr.bf16.mxu0 0
        %744 = vmatpush1.bf16.msra.mxu0 0
        %745 = vmatprep.subr.bf16.mxu0 0
        %746 = vmatpush1.bf16.msra.mxu0 0
        %747 = vmatprep.subr.bf16.mxu0 0
        %748 = vmatpush1.bf16.msra.mxu0 0
        %749 = vmatprep.subr.bf16.mxu0 0
        %750 = vmatpush1.bf16.msra.mxu0 0
        %751 = vmatprep.subr.bf16.mxu0 0
        %752 = vmatpush1.bf16.msra.mxu0 0
        %753 = vmatprep.mubr.bf16.mxu0 0
        %754 = vmatmul.mubr.bf16.gmra.mrb[0].mxu0 %v432
        %v755 = vpop.f32.mrb[0].mxu0
        %v756 = vadd.f32 0.0, %v755
        %v757 = vpop.f32.mrb[0].mxu0
        %v758 = vadd.f32 0.0, %v757
        %v759 = vpop.f32.mrb[0].mxu0
        %v760 = vadd.f32 0.0, %v759
        %v761 = vpop.f32.mrb[0].mxu0
        %v762 = vadd.f32 0.0, %v761
        %763 = vmatprep.mubr.bf16.mxu0 0
        %764 = vmatmul.mubr.bf16.gmra.mrb[0].mxu0 %v433
        %v765 = vpop.f32.mrb[0].mxu0
        %v766 = vadd.f32 0.0, %v765
        %v767 = vpop.f32.mrb[0].mxu0
        %v768 = vadd.f32 0.0, %v767
        %v769 = vpop.f32.mrb[0].mxu0
        %v770 = vadd.f32 0.0, %v769
        %v771 = vpop.f32.mrb[0].mxu0
        %v772 = vadd.f32 0.0, %v771
        %773 = vmatprep.mubr.bf16.mxu0 0
        %774 = vmatmul.mubr.bf16.gmra.mrb[0].mxu0 %v434
        %v775 = vpop.f32.mrb[0].mxu0
        %v776 = vadd.f32 0.0, %v775
        %v777 = vpop.f32.mrb[0].mxu0
        %v778 = vadd.f32 0.0, %v777
        %v779 = vpop.f32.mrb[0].mxu0
        %v780 = vadd.f32 0.0, %v779
        %v781 = vpop.f32.mrb[0].mxu0
        %v782 = vadd.f32 0.0, %v781
        %783 = vmatprep.mubr.bf16.mxu0 0
        %784 = vmatmul.mubr.bf16.gmra.mrb[0].mxu0 %v435
        %v785 = vpop.f32.mrb[0].mxu0
        %v786 = vadd.f32 0.0, %v785
        %v787 = vpop.f32.mrb[0].mxu0
        %v788 = vadd.f32 0.0, %v787
        %v789 = vpop.f32.mrb[0].mxu0
        %v790 = vadd.f32 0.0, %v789
        %v791 = vpop.f32.mrb[0].mxu0
        %v792 = vadd.f32 0.0, %v791
        %793 = vmatprep.mubr.bf16.mxu0 0
        %794 = vmatmul.mubr.bf16.gmra.mrb[0].mxu0 %v436
        %v795 = vpop.f32.mrb[0].mxu0
        %v796 = vadd.f32 0.0, %v795
        %v797 = vpop.f32.mrb[0].mxu0
        %v798 = vadd.f32 0.0, %v797
        %v799 = vpop.f32.mrb[0].mxu0
        %v800 = vadd.f32 0.0, %v799
        %v801 = vpop.f32.mrb[0].mxu0
        %v802 = vadd.f32 0.0, %v801
        %803 = vmatprep.mubr.bf16.mxu0 0
        %804 = vmatmul.mubr.bf16.gmra.mrb[0].mxu0 %v437
        %v805 = vpop.f32.mrb[0].mxu0
        %v806 = vadd.f32 0.0, %v805
        %v807 = vpop.f32.mrb[0].mxu0
        %v808 = vadd.f32 0.0, %v807
        %v809 = vpop.f32.mrb[0].mxu0
        %v810 = vadd.f32 0.0, %v809
        %v811 = vpop.f32.mrb[0].mxu0
        %v812 = vadd.f32 0.0, %v811
        %813 = vmatprep.mubr.bf16.mxu0 0
        %814 = vmatmul.mubr.bf16.gmra.mrb[0].mxu0 %v438
        %v815 = vpop.f32.mrb[0].mxu0
        %v816 = vadd.f32 0.0, %v815
        %v817 = vpop.f32.mrb[0].mxu0
        %v818 = vadd.f32 0.0, %v817
        %v819 = vpop.f32.mrb[0].mxu0
        %v820 = vadd.f32 0.0, %v819
        %v821 = vpop.f32.mrb[0].mxu0
        %v822 = vadd.f32 0.0, %v821
        %823 = vmatprep.mubr.bf16.mxu0 0
        %824 = vmatmul.mubr.bf16.gmra.mrb[0].mxu0 %v439
        %v825 = vpop.f32.mrb[0].mxu0
        %v826 = vadd.f32 0.0, %v825
        %v827 = vpop.f32.mrb[0].mxu0
        %v828 = vadd.f32 0.0, %v827
        %v829 = vpop.f32.mrb[0].mxu0
        %v830 = vadd.f32 0.0, %v829
        %v831 = vpop.f32.mrb[0].mxu0
        %v832 = vadd.f32 0.0, %v831
        %833 = vdwg.mxu0
        %v834 = vadd.f32 %v288, %v643
        %v835 = vadd.f32 %v289, %v645
        %v836 = vadd.f32 %v290, %v756
        %v837 = vadd.f32 %v291, %v758
        %v838 = vadd.f32 %v292, %v647
        %v839 = vadd.f32 %v293, %v649
        %v840 = vadd.f32 %v294, %v760
        %v841 = vadd.f32 %v295, %v762
        %v842 = vadd.f32 %v296, %v653
        %v843 = vadd.f32 %v297, %v655
        %v844 = vadd.f32 %v298, %v766
        %v845 = vadd.f32 %v299, %v768
        %v846 = vadd.f32 %v300, %v657
        %v847 = vadd.f32 %v301, %v659
        %v848 = vadd.f32 %v302, %v770
        %v849 = vadd.f32 %v303, %v772
        %v850 = vadd.f32 %v304, %v663
        %v851 = vadd.f32 %v305, %v665
        %v852 = vadd.f32 %v306, %v776
        %v853 = vadd.f32 %v307, %v778
        %v854 = vadd.f32 %v308, %v667
        %v855 = vadd.f32 %v309, %v669
        %v856 = vadd.f32 %v310, %v780
        %v857 = vadd.f32 %v311, %v782
        %v858 = vadd.f32 %v312, %v673
        %v859 = vadd.f32 %v313, %v675
        %v860 = vadd.f32 %v314, %v786
        %v861 = vadd.f32 %v315, %v788
        %v862 = vadd.f32 %v316, %v677
        %v863 = vadd.f32 %v317, %v679
        %v864 = vadd.f32 %v318, %v790
        %v865 = vadd.f32 %v319, %v792
        %v866 = vadd.f32 %v320, %v683
        %v867 = vadd.f32 %v321, %v685
        %v868 = vadd.f32 %v322, %v796
        %v869 = vadd.f32 %v323, %v798
        %v870 = vadd.f32 %v324, %v687
        %v871 = vadd.f32 %v325, %v689
        %v872 = vadd.f32 %v326, %v800
        %v873 = vadd.f32 %v327, %v802
        %v874 = vadd.f32 %v328, %v693
        %v875 = vadd.f32 %v329, %v695
        %v876 = vadd.f32 %v330, %v806
        %v877 = vadd.f32 %v331, %v808
        %v878 = vadd.f32 %v332, %v697
        %v879 = vadd.f32 %v333, %v699
        %v880 = vadd.f32 %v334, %v810
        %v881 = vadd.f32 %v335, %v812
        %v882 = vadd.f32 %v336, %v703
        %v883 = vadd.f32 %v337, %v705
        %v884 = vadd.f32 %v338, %v816
        %v885 = vadd.f32 %v339, %v818
        %v886 = vadd.f32 %v340, %v707
        %v887 = vadd.f32 %v341, %v709
        %v888 = vadd.f32 %v342, %v820
        %v889 = vadd.f32 %v343, %v822
        %v890 = vadd.f32 %v344, %v713
        %v891 = vadd.f32 %v345, %v715
        %v892 = vadd.f32 %v346, %v826
        %v893 = vadd.f32 %v347, %v828
        %v894 = vadd.f32 %v348, %v717
        %v895 = vadd.f32 %v349, %v719
        %v896 = vadd.f32 %v350, %v830
        %v897 = vadd.f32 %v351, %v832
        %898 = vst [vmem:[#allocation2] sm:$0xff] %v834
        %899 = vst [vmem:[#allocation2 + $0x8] sm:$0xff] %v835
        %900 = vst [vmem:[#allocation2 + $0x10] sm:$0xff] %v836
        %901 = vst [vmem:[#allocation2 + $0x18] sm:$0xff] %v837
        %902 = vst [vmem:[#allocation2 + $0x20] sm:$0xff] %v838
        %903 = vst [vmem:[#allocation2 + $0x28] sm:$0xff] %v839
        %904 = vst [vmem:[#allocation2 + $0x30] sm:$0xff] %v840
        %905 = vst [vmem:[#allocation2 + $0x38] sm:$0xff] %v841
        %906 = vst [vmem:[#allocation2 + $0x40] sm:$0xff] %v842
        %907 = vst [vmem:[#allocation2 + $0x48] sm:$0xff] %v843
        %908 = vst [vmem:[#allocation2 + $0x50] sm:$0xff] %v844
        %909 = vst [vmem:[#allocation2 + $0x58] sm:$0xff] %v845
        %910 = vst [vmem:[#allocation2 + $0x60] sm:$0xff] %v846
        %911 = vst [vmem:[#allocation2 + $0x68] sm:$0xff] %v847
        %912 = vst [vmem:[#allocation2 + $0x70] sm:$0xff] %v848
        %913 = vst [vmem:[#allocation2 + $0x78] sm:$0xff] %v849
        %914 = vst [vmem:[#allocation2 + $0x80] sm:$0xff] %v850
        %915 = vst [vmem:[#allocation2 + $0x88] sm:$0xff] %v851
        %916 = vst [vmem:[#allocation2 + $0x90] sm:$0xff] %v852
        %917 = vst [vmem:[#allocation2 + $0x98] sm:$0xff] %v853
        %918 = vst [vmem:[#allocation2 + $0xa0] sm:$0xff] %v854
        %919 = vst [vmem:[#allocation2 + $0xa8] sm:$0xff] %v855
        %920 = vst [vmem:[#allocation2 + $0xb0] sm:$0xff] %v856
        %921 = vst [vmem:[#allocation2 + $0xb8] sm:$0xff] %v857
        %922 = vst [vmem:[#allocation2 + $0xc0] sm:$0xff] %v858
        %923 = vst [vmem:[#allocation2 + $0xc8] sm:$0xff] %v859
        %924 = vst [vmem:[#allocation2 + $0xd0] sm:$0xff] %v860
        %925 = vst [vmem:[#allocation2 + $0xd8] sm:$0xff] %v861
        %926 = vst [vmem:[#allocation2 + $0xe0] sm:$0xff] %v862
        %927 = vst [vmem:[#allocation2 + $0xe8] sm:$0xff] %v863
        %928 = vst [vmem:[#allocation2 + $0xf0] sm:$0xff] %v864
        %929 = vst [vmem:[#allocation2 + $0xf8] sm:$0xff] %v865
        %930 = vst [vmem:[#allocation2 + $0x100] sm:$0xff] %v866
        %931 = vst [vmem:[#allocation2 + $0x108] sm:$0xff] %v867
        %932 = vst [vmem:[#allocation2 + $0x110] sm:$0xff] %v868
        %933 = vst [vmem:[#allocation2 + $0x118] sm:$0xff] %v869
        %934 = vst [vmem:[#allocation2 + $0x120] sm:$0xff] %v870
        %935 = vst [vmem:[#allocation2 + $0x128] sm:$0xff] %v871
        %936 = vst [vmem:[#allocation2 + $0x130] sm:$0xff] %v872
        %937 = vst [vmem:[#allocation2 + $0x138] sm:$0xff] %v873
        %938 = vst [vmem:[#allocation2 + $0x140] sm:$0xff] %v874
        %939 = vst [vmem:[#allocation2 + $0x148] sm:$0xff] %v875
        %940 = vst [vmem:[#allocation2 + $0x150] sm:$0xff] %v876
        %941 = vst [vmem:[#allocation2 + $0x158] sm:$0xff] %v877
        %942 = vst [vmem:[#allocation2 + $0x160] sm:$0xff] %v878
        %943 = vst [vmem:[#allocation2 + $0x168] sm:$0xff] %v879
        %944 = vst [vmem:[#allocation2 + $0x170] sm:$0xff] %v880
        %945 = vst [vmem:[#allocation2 + $0x178] sm:$0xff] %v881
        %946 = vst [vmem:[#allocation2 + $0x180] sm:$0xff] %v882
        %947 = vst [vmem:[#allocation2 + $0x188] sm:$0xff] %v883
        %948 = vst [vmem:[#allocation2 + $0x190] sm:$0xff] %v884
        %949 = vst [vmem:[#allocation2 + $0x198] sm:$0xff] %v885
        %950 = vst [vmem:[#allocation2 + $0x1a0] sm:$0xff] %v886
        %951 = vst [vmem:[#allocation2 + $0x1a8] sm:$0xff] %v887
        %952 = vst [vmem:[#allocation2 + $0x1b0] sm:$0xff] %v888
        %953 = vst [vmem:[#allocation2 + $0x1b8] sm:$0xff] %v889
        %954 = vst [vmem:[#allocation2 + $0x1c0] sm:$0xff] %v890
        %955 = vst [vmem:[#allocation2 + $0x1c8] sm:$0xff] %v891
        %956 = vst [vmem:[#allocation2 + $0x1d0] sm:$0xff] %v892
        %957 = vst [vmem:[#allocation2 + $0x1d8] sm:$0xff] %v893
        %958 = vst [vmem:[#allocation2 + $0x1e0] sm:$0xff] %v894
        %959 = vst [vmem:[#allocation2 + $0x1e8] sm:$0xff] %v895
        %960 = vst [vmem:[#allocation2 + $0x1f0] sm:$0xff] %v896
        %961 = vst [vmem:[#allocation2 + $0x1f8] sm:$0xff] %v897
        // Predicated region
        $region41: #{tpu_custom_call.1} parent=27 // pred_check
          %p962 = pneg %p220
        $region42: #{tpu_custom_call.1} parent=27 // pred_check_branch
          %964 = sbr.rel (%p962) target = $region44
        $region43: #{tpu_custom_call.1} parent=27 // pred_region
          %v965 = vld [vmem:[#allocation2] sm:$0xff]
          %v966 = vld [vmem:[#allocation2 + $0x8] sm:$0xff]
          %v967 = vld [vmem:[#allocation2 + $0x10] sm:$0xff]
          %v968 = vld [vmem:[#allocation2 + $0x18] sm:$0xff]
          %v969 = vld [vmem:[#allocation2 + $0x20] sm:$0xff]
          %v970 = vld [vmem:[#allocation2 + $0x28] sm:$0xff]
          %v971 = vld [vmem:[#allocation2 + $0x30] sm:$0xff]
          %v972 = vld [vmem:[#allocation2 + $0x38] sm:$0xff]
          %v973 = vld [vmem:[#allocation2 + $0x40] sm:$0xff]
          %v974 = vld [vmem:[#allocation2 + $0x48] sm:$0xff]
          %v975 = vld [vmem:[#allocation2 + $0x50] sm:$0xff]
          %v976 = vld [vmem:[#allocation2 + $0x58] sm:$0xff]
          %v977 = vld [vmem:[#allocation2 + $0x60] sm:$0xff]
          %v978 = vld [vmem:[#allocation2 + $0x68] sm:$0xff]
          %v979 = vld [vmem:[#allocation2 + $0x70] sm:$0xff]
          %v980 = vld [vmem:[#allocation2 + $0x78] sm:$0xff]
          %v981 = vld [vmem:[#allocation2 + $0x80] sm:$0xff]
          %v982 = vld [vmem:[#allocation2 + $0x88] sm:$0xff]
          %v983 = vld [vmem:[#allocation2 + $0x90] sm:$0xff]
          %v984 = vld [vmem:[#allocation2 + $0x98] sm:$0xff]
          %v985 = vld [vmem:[#allocation2 + $0xa0] sm:$0xff]
          %v986 = vld [vmem:[#allocation2 + $0xa8] sm:$0xff]
          %v987 = vld [vmem:[#allocation2 + $0xb0] sm:$0xff]
          %v988 = vld [vmem:[#allocation2 + $0xb8] sm:$0xff]
          %v989 = vld [vmem:[#allocation2 + $0xc0] sm:$0xff]
          %v990 = vld [vmem:[#allocation2 + $0xc8] sm:$0xff]
          %v991 = vld [vmem:[#allocation2 + $0xd0] sm:$0xff]
          %v992 = vld [vmem:[#allocation2 + $0xd8] sm:$0xff]
          %v993 = vld [vmem:[#allocation2 + $0xe0] sm:$0xff]
          %v994 = vld [vmem:[#allocation2 + $0xe8] sm:$0xff]
          %v995 = vld [vmem:[#allocation2 + $0xf0] sm:$0xff]
          %v996 = vld [vmem:[#allocation2 + $0xf8] sm:$0xff]
          %v997 = vld [vmem:[#allocation2 + $0x100] sm:$0xff]
          %v998 = vld [vmem:[#allocation2 + $0x108] sm:$0xff]
          %v999 = vld [vmem:[#allocation2 + $0x110] sm:$0xff]
          %v1000 = vld [vmem:[#allocation2 + $0x118] sm:$0xff]
          %v1001 = vld [vmem:[#allocation2 + $0x120] sm:$0xff]
          %v1002 = vld [vmem:[#allocation2 + $0x128] sm:$0xff]
          %v1003 = vld [vmem:[#allocation2 + $0x130] sm:$0xff]
          %v1004 = vld [vmem:[#allocation2 + $0x138] sm:$0xff]
          %v1005 = vld [vmem:[#allocation2 + $0x140] sm:$0xff]
          %v1006 = vld [vmem:[#allocation2 + $0x148] sm:$0xff]
          %v1007 = vld [vmem:[#allocation2 + $0x150] sm:$0xff]
          %v1008 = vld [vmem:[#allocation2 + $0x158] sm:$0xff]
          %v1009 = vld [vmem:[#allocation2 + $0x160] sm:$0xff]
          %v1010 = vld [vmem:[#allocation2 + $0x168] sm:$0xff]
          %v1011 = vld [vmem:[#allocation2 + $0x170] sm:$0xff]
          %v1012 = vld [vmem:[#allocation2 + $0x178] sm:$0xff]
          %v1013 = vld [vmem:[#allocation2 + $0x180] sm:$0xff]
          %v1014 = vld [vmem:[#allocation2 + $0x188] sm:$0xff]
          %v1015 = vld [vmem:[#allocation2 + $0x190] sm:$0xff]
          %v1016 = vld [vmem:[#allocation2 + $0x198] sm:$0xff]
          %v1017 = vld [vmem:[#allocation2 + $0x1a0] sm:$0xff]
          %v1018 = vld [vmem:[#allocation2 + $0x1a8] sm:$0xff]
          %v1019 = vld [vmem:[#allocation2 + $0x1b0] sm:$0xff]
          %v1020 = vld [vmem:[#allocation2 + $0x1b8] sm:$0xff]
          %v1021 = vld [vmem:[#allocation2 + $0x1c0] sm:$0xff]
          %v1022 = vld [vmem:[#allocation2 + $0x1c8] sm:$0xff]
          %v1023 = vld [vmem:[#allocation2 + $0x1d0] sm:$0xff]
          %v1024 = vld [vmem:[#allocation2 + $0x1d8] sm:$0xff]
          %v1025 = vld [vmem:[#allocation2 + $0x1e0] sm:$0xff]
          %v1026 = vld [vmem:[#allocation2 + $0x1e8] sm:$0xff]
          %v1027 = vld [vmem:[#allocation2 + $0x1f0] sm:$0xff]
          %v1028 = vld [vmem:[#allocation2 + $0x1f8] sm:$0xff]
          %v1029 = vpack.c.bf16 %v969, %v965
          %v1030 = vpack.c.bf16 %v970, %v966
          %v1031 = vpack.c.bf16 %v971, %v967
          %v1032 = vpack.c.bf16 %v972, %v968
          %v1033 = vpack.c.bf16 %v977, %v973
          %v1034 = vpack.c.bf16 %v978, %v974
          %v1035 = vpack.c.bf16 %v979, %v975
          %v1036 = vpack.c.bf16 %v980, %v976
          %v1037 = vpack.c.bf16 %v985, %v981
          %v1038 = vpack.c.bf16 %v986, %v982
          %v1039 = vpack.c.bf16 %v987, %v983
          %v1040 = vpack.c.bf16 %v988, %v984
          %v1041 = vpack.c.bf16 %v993, %v989
          %v1042 = vpack.c.bf16 %v994, %v990
          %v1043 = vpack.c.bf16 %v995, %v991
          %v1044 = vpack.c.bf16 %v996, %v992
          %v1045 = vpack.c.bf16 %v1001, %v997
          %v1046 = vpack.c.bf16 %v1002, %v998
          %v1047 = vpack.c.bf16 %v1003, %v999
          %v1048 = vpack.c.bf16 %v1004, %v1000
          %v1049 = vpack.c.bf16 %v1009, %v1005
          %v1050 = vpack.c.bf16 %v1010, %v1006
          %v1051 = vpack.c.bf16 %v1011, %v1007
          %v1052 = vpack.c.bf16 %v1012, %v1008
          %v1053 = vpack.c.bf16 %v1017, %v1013
          %v1054 = vpack.c.bf16 %v1018, %v1014
          %v1055 = vpack.c.bf16 %v1019, %v1015
          %v1056 = vpack.c.bf16 %v1020, %v1016
          %v1057 = vpack.c.bf16 %v1025, %v1021
          %v1058 = vpack.c.bf16 %v1026, %v1022
          %v1059 = vpack.c.bf16 %v1027, %v1023
          %v1060 = vpack.c.bf16 %v1028, %v1024
          %v1093 = vunpack.c.l.b16 %v1029
          %v1094 = vunpack.c.l.b16 %v1030
          %v1095 = vunpack.c.l.b16 %v1031
          %v1096 = vunpack.c.l.b16 %v1032
          %v1097 = vunpack.c.h.b16 %v1029
          %v1098 = vunpack.c.h.b16 %v1030
          %v1099 = vunpack.c.h.b16 %v1031
          %v1100 = vunpack.c.h.b16 %v1032
          %v1101 = vunpack.c.l.b16 %v1033
          %v1102 = vunpack.c.l.b16 %v1034
          %v1103 = vunpack.c.l.b16 %v1035
          %v1104 = vunpack.c.l.b16 %v1036
          %v1105 = vunpack.c.h.b16 %v1033
          %v1106 = vunpack.c.h.b16 %v1034
          %v1107 = vunpack.c.h.b16 %v1035
          %v1108 = vunpack.c.h.b16 %v1036
          %v1109 = vunpack.c.l.b16 %v1037
          %v1110 = vunpack.c.l.b16 %v1038
          %v1111 = vunpack.c.l.b16 %v1039
          %v1112 = vunpack.c.l.b16 %v1040
          %v1113 = vunpack.c.h.b16 %v1037
          %v1114 = vunpack.c.h.b16 %v1038
          %v1115 = vunpack.c.h.b16 %v1039
          %v1116 = vunpack.c.h.b16 %v1040
          %v1117 = vunpack.c.l.b16 %v1041
          %v1118 = vunpack.c.l.b16 %v1042
          %v1119 = vunpack.c.l.b16 %v1043
          %v1120 = vunpack.c.l.b16 %v1044
          %v1121 = vunpack.c.h.b16 %v1041
          %v1122 = vunpack.c.h.b16 %v1042
          %v1123 = vunpack.c.h.b16 %v1043
          %v1124 = vunpack.c.h.b16 %v1044
          %v1125 = vunpack.c.l.b16 %v1045
          %v1126 = vunpack.c.l.b16 %v1046
          %v1127 = vunpack.c.l.b16 %v1047
          %v1128 = vunpack.c.l.b16 %v1048
          %v1129 = vunpack.c.h.b16 %v1045
          %v1130 = vunpack.c.h.b16 %v1046
          %v1131 = vunpack.c.h.b16 %v1047
          %v1132 = vunpack.c.h.b16 %v1048
          %v1133 = vunpack.c.l.b16 %v1049
          %v1134 = vunpack.c.l.b16 %v1050
          %v1135 = vunpack.c.l.b16 %v1051
          %v1136 = vunpack.c.l.b16 %v1052
          %v1137 = vunpack.c.h.b16 %v1049
          %v1138 = vunpack.c.h.b16 %v1050
          %v1139 = vunpack.c.h.b16 %v1051
          %v1140 = vunpack.c.h.b16 %v1052
          %v1141 = vunpack.c.l.b16 %v1053
          %v1142 = vunpack.c.l.b16 %v1054
          %v1143 = vunpack.c.l.b16 %v1055
          %v1144 = vunpack.c.l.b16 %v1056
          %v1145 = vunpack.c.h.b16 %v1053
          %v1146 = vunpack.c.h.b16 %v1054
          %v1147 = vunpack.c.h.b16 %v1055
          %v1148 = vunpack.c.h.b16 %v1056
          %v1149 = vunpack.c.l.b16 %v1057
          %v1150 = vunpack.c.l.b16 %v1058
          %v1151 = vunpack.c.l.b16 %v1059
          %v1152 = vunpack.c.l.b16 %v1060
          %v1153 = vunpack.c.h.b16 %v1057
          %v1154 = vunpack.c.h.b16 %v1058
          %v1155 = vunpack.c.h.b16 %v1059
          %v1156 = vunpack.c.h.b16 %v1060
          %v1157 = vpack.c.b16 %v1094, %v1093
          %v1158 = vpack.c.b16 %v1096, %v1095
          %v1159 = vpack.c.b16 %v1098, %v1097
          %v1160 = vpack.c.b16 %v1100, %v1099
          %v1161 = vpack.c.b16 %v1102, %v1101
          %v1162 = vpack.c.b16 %v1104, %v1103
          %v1163 = vpack.c.b16 %v1106, %v1105
          %v1164 = vpack.c.b16 %v1108, %v1107
          %v1165 = vpack.c.b16 %v1110, %v1109
          %v1166 = vpack.c.b16 %v1112, %v1111
          %v1167 = vpack.c.b16 %v1114, %v1113
          %v1168 = vpack.c.b16 %v1116, %v1115
          %v1169 = vpack.c.b16 %v1118, %v1117
          %v1170 = vpack.c.b16 %v1120, %v1119
          %v1171 = vpack.c.b16 %v1122, %v1121
          %v1172 = vpack.c.b16 %v1124, %v1123
          %v1173 = vpack.c.b16 %v1126, %v1125
          %v1174 = vpack.c.b16 %v1128, %v1127
          %v1175 = vpack.c.b16 %v1130, %v1129
          %v1176 = vpack.c.b16 %v1132, %v1131
          %v1177 = vpack.c.b16 %v1134, %v1133
          %v1178 = vpack.c.b16 %v1136, %v1135
          %v1179 = vpack.c.b16 %v1138, %v1137
          %v1180 = vpack.c.b16 %v1140, %v1139
          %v1181 = vpack.c.b16 %v1142, %v1141
          %v1182 = vpack.c.b16 %v1144, %v1143
          %v1183 = vpack.c.b16 %v1146, %v1145
          %v1184 = vpack.c.b16 %v1148, %v1147
          %v1185 = vpack.c.b16 %v1150, %v1149
          %v1186 = vpack.c.b16 %v1152, %v1151
          %v1187 = vpack.c.b16 %v1154, %v1153
          %v1188 = vpack.c.b16 %v1156, %v1155
          %1221 = vst [vmem:[%s213] sm:$0xff] %v1157
          %1222 = vst [vmem:[%s213 + $0x8] sm:$0xff] %v1158
          %1223 = vst [vmem:[%s213 + $0x10] sm:$0xff] %v1159
          %1224 = vst [vmem:[%s213 + $0x18] sm:$0xff] %v1160
          %1225 = vst [vmem:[%s213 + $0x20] sm:$0xff] %v1161
          %1226 = vst [vmem:[%s213 + $0x28] sm:$0xff] %v1162
          %1227 = vst [vmem:[%s213 + $0x30] sm:$0xff] %v1163
          %1228 = vst [vmem:[%s213 + $0x38] sm:$0xff] %v1164
          %1229 = vst [vmem:[%s213 + $0x40] sm:$0xff] %v1165
          %1230 = vst [vmem:[%s213 + $0x48] sm:$0xff] %v1166
          %1231 = vst [vmem:[%s213 + $0x50] sm:$0xff] %v1167
          %1232 = vst [vmem:[%s213 + $0x58] sm:$0xff] %v1168
          %1233 = vst [vmem:[%s213 + $0x60] sm:$0xff] %v1169
          %1234 = vst [vmem:[%s213 + $0x68] sm:$0xff] %v1170
          %1235 = vst [vmem:[%s213 + $0x70] sm:$0xff] %v1171
          %1236 = vst [vmem:[%s213 + $0x78] sm:$0xff] %v1172
          %1237 = vst [vmem:[%s213 + $0x80] sm:$0xff] %v1173
          %1238 = vst [vmem:[%s213 + $0x88] sm:$0xff] %v1174
          %1239 = vst [vmem:[%s213 + $0x90] sm:$0xff] %v1175
          %1240 = vst [vmem:[%s213 + $0x98] sm:$0xff] %v1176
          %1241 = vst [vmem:[%s213 + $0xa0] sm:$0xff] %v1177
          %1242 = vst [vmem:[%s213 + $0xa8] sm:$0xff] %v1178
          %1243 = vst [vmem:[%s213 + $0xb0] sm:$0xff] %v1179
          %1244 = vst [vmem:[%s213 + $0xb8] sm:$0xff] %v1180
          %1245 = vst [vmem:[%s213 + $0xc0] sm:$0xff] %v1181
          %1246 = vst [vmem:[%s213 + $0xc8] sm:$0xff] %v1182
          %1247 = vst [vmem:[%s213 + $0xd0] sm:$0xff] %v1183
          %1248 = vst [vmem:[%s213 + $0xd8] sm:$0xff] %v1184
          %1249 = vst [vmem:[%s213 + $0xe0] sm:$0xff] %v1185
          %1250 = vst [vmem:[%s213 + $0xe8] sm:$0xff] %v1186
          %1251 = vst [vmem:[%s213 + $0xf0] sm:$0xff] %v1187
          %1252 = vst [vmem:[%s213 + $0xf8] sm:$0xff] %v1188
        $region44: #{tpu_custom_call.1} parent=27 // pred_fallthru
          _
        %s1253 = sand.u32 %s105, 1
        %s1254 = scalar_lea.sflag [#allocation5], %s1253
        %s1255 = sand.u32 %s105, 1
        %s1256 = smul.addr %s1255, 256
        %s1257 = scalar_lea.vmem [#allocation8], %s1256
        // Predicated region
        $region45: #{tpu_custom_call.1} parent=27 // pred_check
          %p1258 = pneg %p115
        $region46: #{tpu_custom_call.1} parent=27 // pred_check_branch
          %1260 = sbr.rel (%p1258) target = $region48
        $region47: #{tpu_custom_call.1} parent=27 // pred_region
          %s1261 = smul.u32 16, %s25
          %s1262 = smul.u32 4, %s26
          %s1264 = ssub.s32 4096, 4096
          %1265 = vsyncadd %s1254, %s1264
          %s1266 = smul.addr %s1261, 12
          %s1267 = sadd.s32 %s1262, %s1266
          %s1268 = smul.addr %s1267, 64
          %s1269 = scalar_lea.hbm %s2, %s1268
          %s1270 = sshll.u32 %s1257, 4
          %s1271 = int_to_ptr.vmem [resolvable:$true] %s1270
          %1276 = dma.vmem_to_hbm [thread:$0]  %s1271, 4096, %s1269, %s1254, 256, 768, 16
        $region48: #{tpu_custom_call.1} parent=27 // pred_fallthru
          _
      $region28: #{tpu_custom_call.1} parent=5 // pred_fallthru
        _
      %p1277 = scmp.le.s32.totalorder 2, %s15
      // Predicated region
      $region49: #{tpu_custom_call.1} parent=5 // pred_check
        %p1278 = pneg %p1277
      $region50: #{tpu_custom_call.1} parent=5 // pred_check_branch
        %1280 = sbr.rel (%p1278) target = $region52
      $region51: #{tpu_custom_call.1} parent=5 // pred_region
        %s1281 = ssub.s32 %s15, 2
        // Predicated region
        $region53: #{tpu_custom_call.1} parent=51 // pred_check
          %p1282 = pneg %p121
        $region54: #{tpu_custom_call.1} parent=51 // pred_check_branch
          %1284 = sbr.rel (%p1282) target = $region56
        $region55: #{tpu_custom_call.1} parent=51 // pred_region
          %s1285 = sand.u32 %s106, 1
          %s1286 = scalar_lea.sflag [#allocation5], %s1285
          %s1287 = sand.u32 %s106, 1
          %s1288 = smul.addr %s1287, 256
          %s1289 = scalar_lea.vmem [#allocation8], %s1288
          %1290 = dma.done %s1286, 4096
        $region56: #{tpu_custom_call.1} parent=51 // pred_fallthru
          _
      $region52: #{tpu_custom_call.1} parent=5 // pred_fallthru
        _
    $region6: #{tpu_custom_call.1} parent=1 // loop_footer
      %s19 = sadd.s32 1, %s15
    $region7: #{tpu_custom_call.1} parent=1 // loop_footer_branch
      %14 = sbr.rel target = $region3
    $region8: #{tpu_custom_call.1} parent=1 // loop_exit
      _
    %1291 = vsyncpa [#allocation4], 1
    %s1292 = scalar_lea.sflag [#allocation4], 1
    %1293 = vsyncpa %s1292, 1
    %1294 = vsyncpa [#allocation7], 1
    %s1295 = scalar_lea.sflag [#allocation7], 1
    %1296 = vsyncpa %s1295, 1
    %1297 = vsyncpa [#allocation5], 1
    %s1298 = scalar_lea.sflag [#allocation5], 1
    %1299 = vsyncpa %s1298, 1

</llo_original>
